<compile_context>
chip_gen: v7x
topology: tpu7x:2x2x1
jax: 0.10.0
libtpu: 0.0.40
codegen_flags: <defaults>
</compile_context>

<pallas_src>
import functools
import math

import jax
import jax.numpy as jnp
import numpy as np
from jax import lax
from jax.experimental import pallas as pl
from jax.experimental.pallas import tpu as pltpu


# ----------------------------------------------------------------------------
# Fused encoder layer kernel.
# Grid = (batch, dff_chunks). Attention + residual are computed once per batch slab
# (chunk 0); the FFN streams W1/W2 chunks and accumulates into an f32 VMEM scratch.
# ----------------------------------------------------------------------------
def encoder_layer_kernel(x_ref,
                         wqkv_ref, bqkv_ref, wo_ref, bo_ref,
                         w1_ref, b1_ref, w2_ref, b2_ref,
                         o_ref, x1_sc, acc_sc, *, num_heads):
    c = pl.program_id(1)

    @pl.when(c == 0)
    def _attention_and_residual():
        x = x_ref[0]                                   # (S, D), input dtype
        S, D = x.shape
        hd = D // num_heads
        scale = 1.0 / math.sqrt(hd)
        x_bf = x.astype(jnp.bfloat16)

        # Fused Q/K/V projection: one bf16 MXU matmul, f32 accumulation.
        qkv = jnp.dot(x_bf, wqkv_ref[...],
                      preferred_element_type=jnp.float32) + bqkv_ref[...]   # (S, 3D)
        q = qkv[:, 0:D].astype(jnp.bfloat16)
        k = qkv[:, D:2 * D].astype(jnp.bfloat16)
        v = qkv[:, 2 * D:3 * D].astype(jnp.bfloat16)

        # Per-head attention; the output projection is folded per head into a single
        # f32 accumulator (no concatenate, no explicit transpose). Residual + output
        # bias seed the accumulator. Static unroll over heads (num_heads is small).
        attn = x.astype(jnp.float32) + bo_ref[...]     # (S, D) f32
        for h in range(num_heads):
            sl = slice(h * hd, (h + 1) * hd)
            qh, kh, vh = q[:, sl], k[:, sl], v[:, sl]
            # q @ k^T via contraction on the last dims (no kh.T materialization).
            scores = lax.dot_general(
                qh, kh, (((1,), (1,)), ((), ())),
                preferred_element_type=jnp.float32) * scale                 # (S, S)
            m = jnp.max(scores, axis=-1, keepdims=True)
            p = jnp.exp(scores - m)
            p = p * pl.reciprocal(jnp.sum(p, axis=-1, keepdims=True), approx=True)
            head_out = jnp.dot(p.astype(jnp.bfloat16), vh,
                               preferred_element_type=jnp.float32)          # (S, hd)
            attn = attn + jnp.dot(head_out.astype(jnp.bfloat16), wo_ref[sl, :],
                                  preferred_element_type=jnp.float32)       # (S, D)

        x1_sc[...] = attn.astype(jnp.bfloat16)          # FFN input (bf16 operand)
        # f32 accumulator carries the second residual AND the final FFN bias b2,
        # so finalize is a bare cast+store.
        acc_sc[...] = attn + b2_ref[...]

    # FFN chunk: acc += relu(x1 @ W1[:, chunk] + b1[chunk]) @ W2[chunk, :]
    h1 = jnp.dot(x1_sc[...], w1_ref[...],
                 preferred_element_type=jnp.float32) + b1_ref[...]
    h1 = jnp.maximum(h1, 0.0)
    acc_sc[...] += jnp.dot(h1.astype(jnp.bfloat16), w2_ref[...],
                           preferred_element_type=jnp.float32)

    @pl.when(c == pl.num_programs(1) - 1)
    def _finalize():
        o_ref[0] = acc_sc[...].astype(o_ref.dtype)


def _pick_dff_chunk(dff, max_chunk=1024):
    """Largest multiple of 128 dividing dff, capped at max_chunk (else dff itself)."""
    if dff <= max_chunk:
        return dff
    for c in range(max_chunk, 127, -128):
        if dff % c == 0:
            return c
    return dff


def encoder_layer(x, kp, num_heads):
    """One fused encoder layer. `kp` holds kernel-ready (bf16 weight) parameters."""
    B, S, D = x.shape
    dff = kp["w1"].shape[1]
    dff_chunk = _pick_dff_chunk(dff)
    n_chunks = dff // dff_chunk

    kernel = functools.partial(encoder_layer_kernel, num_heads=num_heads)
    const = lambda b, c: (0, 0)

    return pl.pallas_call(
        kernel,
        out_shape=jax.ShapeDtypeStruct((B, S, D), x.dtype),
        grid=(B, n_chunks),
        in_specs=[
            pl.BlockSpec((1, S, D), lambda b, c: (b, 0, 0)),      # x: one batch slab
            pl.BlockSpec((D, 3 * D), const),                      # Wqkv (bf16)
            pl.BlockSpec((1, 3 * D), const),                      # bqkv (f32)
            pl.BlockSpec((D, D), const),                          # Wo (bf16)
            pl.BlockSpec((1, D), const),                          # bo (f32)
            pl.BlockSpec((D, dff_chunk), lambda b, c: (0, c)),    # W1 chunk (bf16)
            pl.BlockSpec((1, dff_chunk), lambda b, c: (0, c)),    # b1 chunk (f32)
            pl.BlockSpec((dff_chunk, D), lambda b, c: (c, 0)),    # W2 chunk (bf16)
            pl.BlockSpec((1, D), const),                          # b2 (f32)
        ],
        out_specs=pl.BlockSpec((1, S, D), lambda b, c: (b, 0, 0)),
        scratch_shapes=[
            pltpu.VMEM((S, D), jnp.bfloat16),   # x1 (FFN input, bf16 operand)
            pltpu.VMEM((S, D), jnp.float32),    # f32 accumulator (residual + b2 folded)
        ],
        compiler_params=pltpu.CompilerParams(
            dimension_semantics=("parallel", "arbitrary")),
    )(x, kp["wqkv"], kp["bqkv"], kp["wo"], kp["bo"],
      kp["w1"], kp["b1"], kp["w2"], kp["b2"])


# ----------------------------------------------------------------------------
# Parameter init (mirrors the reference __init__ / _reset_parameters shapes).
# ----------------------------------------------------------------------------
def xavier_uniform(key, shape):
    fan_in, fan_out = shape[0], shape[1]
    bound = math.sqrt(6.0 / (fan_in + fan_out))
    return jax.random.uniform(key, shape, jnp.float32, -bound, bound)


def init_encoder_layer_params(key, input_dim, dim_feedforward):
    keys = jax.random.split(key, 8)
    D, F = input_dim, dim_feedforward
    # Attention projections: xavier_uniform_ weights, zero biases (per _reset_parameters).
    # Stored pre-transposed so the kernel computes x @ W_t + b.
    return {
        "wq": xavier_uniform(keys[0], (D, D)),
        "wk": xavier_uniform(keys[1], (D, D)),
        "wv": xavier_uniform(keys[2], (D, D)),
        "wo": xavier_uniform(keys[3], (D, D)),
        "bq": jnp.zeros((1, D), jnp.float32),
        "bk": jnp.zeros((1, D), jnp.float32),
        "bv": jnp.zeros((1, D), jnp.float32),
        "bo": jnp.zeros((1, D), jnp.float32),
        # FFN: PyTorch default Linear init (uniform +/- 1/sqrt(fan_in)).
        "w1": jax.random.uniform(keys[4], (D, F), jnp.float32,
                                 -1.0 / math.sqrt(D), 1.0 / math.sqrt(D)),
        "b1": jax.random.uniform(keys[5], (1, F), jnp.float32,
                                 -1.0 / math.sqrt(D), 1.0 / math.sqrt(D)),
        "w2": jax.random.uniform(keys[6], (F, D), jnp.float32,
                                 -1.0 / math.sqrt(F), 1.0 / math.sqrt(F)),
        "b2": jax.random.uniform(keys[7], (1, D), jnp.float32,
                                 -1.0 / math.sqrt(F), 1.0 / math.sqrt(F)),
    }


def pack_encoder_layer_params(p):
    """Kernel-ready parameters: fused QKV weight, bf16 weight matrices, f32 biases."""
    bf = jnp.bfloat16
    return {
        "wqkv": jnp.concatenate([p["wq"], p["wk"], p["wv"]], axis=1).astype(bf),
        "bqkv": jnp.concatenate([p["bq"], p["bk"], p["bv"]], axis=1),
        "wo": p["wo"].astype(bf), "bo": p["bo"],
        "w1": p["w1"].astype(bf), "b1": p["b1"],
        "w2": p["w2"].astype(bf), "b2": p["b2"],
    }


class TransformerBlockPallas:
    """Pallas port of TransformerBlock (encoder stack; decoder undefined in source)."""

    def __init__(self, num_encoder_layers, num_decoder_layers, input_dim,
                 num_heads, dim_feedforward, key):
        assert input_dim % num_heads == 0
        self.num_heads = num_heads
        keys = jax.random.split(key, max(num_encoder_layers, 1))
        self.encoder_params = [
            init_encoder_layer_params(keys[i], input_dim, dim_feedforward)
            for i in range(num_encoder_layers)
        ]
        self.encoder_kernel_params = [pack_encoder_layer_params(p)
                                      for p in self.encoder_params]
        # TODO(synk): DecoderBlock is not defined in the reference source; decoder
        # layers are omitted (num_decoder_layers accepted but unused).
        self.num_decoder_layers = num_decoder_layers

    def __call__(self, src, tgt):
        for kp in self.encoder_kernel_params:
            src = encoder_layer(src, kp, self.num_heads)
        # With zero decoder layers the reference forward returns tgt unchanged; the
        # encoded memory is returned as well so the kernel result is observable.
        return src, tgt


# ----------------------------------------------------------------------------
# Pure-JAX reference for the correctness check. Weights are quantized to bf16
# (matching what the kernel's MXU sees); math runs in f32.
# ----------------------------------------------------------------------------
def encoder_layer_ref(x, params, num_heads):
    B, S, D = x.shape
    hd = D // num_heads
    qz = lambda w: w.astype(jnp.bfloat16).astype(jnp.float32)
    q = x @ qz(params["wq"]) + params["bq"]
    k = x @ qz(params["wk"]) + params["bk"]
    v = x @ qz(params["wv"]) + params["bv"]

    def split(t):
        return t.reshape(B, S, num_heads, hd).transpose(0, 2, 1, 3)

    qh, kh, vh = split(q), split(k), split(v)
    scores = jnp.einsum("bhqd,bhkd->bhqk", qh, kh) / math.sqrt(hd)
    p = jax.nn.softmax(scores, axis=-1)
    attn = jnp.einsum("bhqk,bhkd->bhqd", p, vh).transpose(0, 2, 1, 3).reshape(B, S, D)
    x1 = attn @ qz(params["wo"]) + params["bo"] + x
    h1 = jnp.maximum(x1 @ qz(params["w1"]) + params["b1"], 0.0)
    return h1 @ qz(params["w2"]) + params["b2"] + x1


if __name__ == "__main__":
    B, S, D, H, FF = 2, 8, 32, 4, 64
    NUM_ENC, NUM_DEC = 2, 0

    root = jax.random.PRNGKey(0)
    k_model, k_src, k_tgt = jax.random.split(root, 3)

    model = TransformerBlockPallas(NUM_ENC, NUM_DEC, D, H, FF, k_model)

    src = jax.random.normal(k_src, (B, S, D), jnp.float32)
    tgt = jax.random.normal(k_tgt, (B, S, D), jnp.float32)

    memory, tgt_out = model(src, tgt)
    memory = jax.block_until_ready(memory)
    tgt_out = jax.block_until_ready(tgt_out)

    # Correctness check vs pure-JAX reference (bf16 matmul operands in the kernel ->
    # looser tolerance than a pure-f32 comparison).
    ref = src
    for p in model.encoder_params:
        ref = encoder_layer_ref(ref, p, H)
    np.testing.assert_allclose(np.asarray(memory), np.asarray(ref), rtol=5e-2, atol=5e-2)

    print("KERNEL_OK")
</pallas_src>

<mosaic_0001>
module attributes {stable_mosaic.version = 11 : i64} {
  func.func @encoder_layer_kernel(%arg0: i32, %arg1: i32, %arg2: memref<1x8x32xf32, #tpu.memory_space<vmem>>, %arg3: memref<32x96xbf16, #tpu.memory_space<vmem>>, %arg4: memref<1x96xf32, #tpu.memory_space<vmem>>, %arg5: memref<32x32xbf16, #tpu.memory_space<vmem>>, %arg6: memref<1x32xf32, #tpu.memory_space<vmem>>, %arg7: memref<32x64xbf16, #tpu.memory_space<vmem>>, %arg8: memref<1x64xf32, #tpu.memory_space<vmem>>, %arg9: memref<64x32xbf16, #tpu.memory_space<vmem>>, %arg10: memref<1x32xf32, #tpu.memory_space<vmem>>, %arg11: memref<1x8x32xf32, #tpu.memory_space<vmem>>, %arg12: memref<8x32xbf16, #tpu.memory_space<vmem>>, %arg13: memref<8x32xf32, #tpu.memory_space<vmem>>) attributes {dimension_semantics = [#tpu.dimension_semantics<parallel>, #tpu.dimension_semantics<arbitrary>], iteration_bounds = array<i64: 2, 1>, scalar_prefetch = 0 : i64, scratch_operands = 2 : i64, tpu.core_type = #tpu.core_type<tc>, window_params = [{transform_indices = @transform_0, window_bounds = array<i64: 1, 8, 32>}, {pipeline_mode = #tpu.pipeline_mode<synchronous>, transform_indices = @transform_1, window_bounds = array<i64: 32, 96>}, {pipeline_mode = #tpu.pipeline_mode<synchronous>, transform_indices = @transform_2, window_bounds = array<i64: 1, 96>}, {pipeline_mode = #tpu.pipeline_mode<synchronous>, transform_indices = @transform_3, window_bounds = array<i64: 32, 32>}, {pipeline_mode = #tpu.pipeline_mode<synchronous>, transform_indices = @transform_4, window_bounds = array<i64: 1, 32>}, {transform_indices = @transform_5, window_bounds = array<i64: 32, 64>}, {transform_indices = @transform_6, window_bounds = array<i64: 1, 64>}, {transform_indices = @transform_7, window_bounds = array<i64: 64, 32>}, {pipeline_mode = #tpu.pipeline_mode<synchronous>, transform_indices = @transform_8, window_bounds = array<i64: 1, 32>}, {transform_indices = @transform_9, window_bounds = array<i64: 1, 8, 32>}]} {
    %c0_i32 = arith.constant 0 : i32
    %0 = arith.cmpi eq, %arg1, %c0_i32 : i32
    %1 = arith.extui %0 : i1 to i32
    %c0_i32_0 = arith.constant 0 : i32
    %2 = arith.cmpi ne, %1, %c0_i32_0 : i32
    scf.if %2 {
      %c0_16 = arith.constant 0 : index
      %c0_17 = arith.constant 0 : index
      %c0_18 = arith.constant 0 : index
      %20 = vector.load %arg2[%c0_16, %c0_17, %c0_18] : memref<1x8x32xf32, #tpu.memory_space<vmem>>, vector<1x8x32xf32>
      %21 = vector.shape_cast %20 : vector<1x8x32xf32> to vector<8x32xf32>
      %22 = arith.truncf %21 : vector<8x32xf32> to vector<8x32xbf16>
      %c0_19 = arith.constant 0 : index
      %c0_20 = arith.constant 0 : index
      %23 = vector.load %arg3[%c0_19, %c0_20] : memref<32x96xbf16, #tpu.memory_space<vmem>>, vector<32x96xbf16>
      %cst_21 = arith.constant dense<0.000000e+00> : vector<8x96xf32>
      %24 = tpu.matmul %22, %23, %cst_21 {dimension_numbers = #tpu.dot_dimension_numbers<[1], [0], [0], [1], [0, 0, 1, 1], [], []>} : vector<8x32xbf16>, vector<32x96xbf16>, vector<8x96xf32> -> vector<8x96xf32>
      %c0_22 = arith.constant 0 : index
      %c0_23 = arith.constant 0 : index
      %25 = vector.load %arg4[%c0_22, %c0_23] : memref<1x96xf32, #tpu.memory_space<vmem>>, vector<1x96xf32>
      %26 = vector.broadcast %25 : vector<1x96xf32> to vector<8x96xf32>
      %27 = arith.addf %24, %26 : vector<8x96xf32>
      %28 = vector.extract_strided_slice %27 {offsets = [0, 0], sizes = [8, 32], strides = [1, 1]} : vector<8x96xf32> to vector<8x32xf32>
      %29 = arith.truncf %28 : vector<8x32xf32> to vector<8x32xbf16>
      %30 = vector.extract_strided_slice %27 {offsets = [0, 32], sizes = [8, 32], strides = [1, 1]} : vector<8x96xf32> to vector<8x32xf32>
      %31 = arith.truncf %30 : vector<8x32xf32> to vector<8x32xbf16>
      %32 = vector.extract_strided_slice %27 {offsets = [0, 64], sizes = [8, 32], strides = [1, 1]} : vector<8x96xf32> to vector<8x32xf32>
      %33 = arith.truncf %32 : vector<8x32xf32> to vector<8x32xbf16>
      %c0_24 = arith.constant 0 : index
      %c0_25 = arith.constant 0 : index
      %34 = vector.load %arg6[%c0_24, %c0_25] : memref<1x32xf32, #tpu.memory_space<vmem>>, vector<1x32xf32>
      %35 = vector.broadcast %34 : vector<1x32xf32> to vector<8x32xf32>
      %36 = arith.addf %21, %35 : vector<8x32xf32>
      %37 = vector.extract_strided_slice %29 {offsets = [0, 0], sizes = [8, 8], strides = [1, 1]} : vector<8x32xbf16> to vector<8x8xbf16>
      %38 = vector.extract_strided_slice %31 {offsets = [0, 0], sizes = [8, 8], strides = [1, 1]} : vector<8x32xbf16> to vector<8x8xbf16>
      %39 = vector.extract_strided_slice %33 {offsets = [0, 0], sizes = [8, 8], strides = [1, 1]} : vector<8x32xbf16> to vector<8x8xbf16>
      %cst_26 = arith.constant dense<0.000000e+00> : vector<8x8xf32>
      %40 = tpu.matmul %37, %38, %cst_26 {dimension_numbers = #tpu.dot_dimension_numbers<[1], [1], [0], [0], [0, 0, 1, 0], [], []>} : vector<8x8xbf16>, vector<8x8xbf16>, vector<8x8xf32> -> vector<8x8xf32>
      %cst_27 = arith.constant 0.353553385 : f32
      %41 = vector.broadcast %cst_27 : f32 to vector<8x8xf32>
      %42 = arith.mulf %40, %41 : vector<8x8xf32>
      %cst_28 = arith.constant dense<0xFF800000> : vector<8xf32>
      %43 = vector.multi_reduction <maximumf>, %42, %cst_28 [1] : vector<8x8xf32> to vector<8xf32>
      %44 = vector.shape_cast %43 : vector<8xf32> to vector<8x1xf32>
      %45 = vector.broadcast %44 : vector<8x1xf32> to vector<8x8xf32>
      %46 = arith.subf %42, %45 : vector<8x8xf32>
      %47 = math.exp %46 : vector<8x8xf32>
      %cst_29 = arith.constant dense<0.000000e+00> : vector<8xf32>
      %48 = vector.multi_reduction <add>, %47, %cst_29 [1] : vector<8x8xf32> to vector<8xf32>
      %49 = vector.shape_cast %48 : vector<8xf32> to vector<8x1xf32>
      %50 = tpu.reciprocal %49 {approx = true} : vector<8x1xf32> -> vector<8x1xf32>
      %51 = vector.broadcast %50 : vector<8x1xf32> to vector<8x8xf32>
      %52 = arith.mulf %47, %51 : vector<8x8xf32>
      %53 = arith.truncf %52 : vector<8x8xf32> to vector<8x8xbf16>
      %cst_30 = arith.constant dense<0.000000e+00> : vector<8x8xf32>
      %54 = tpu.matmul %53, %39, %cst_30 {dimension_numbers = #tpu.dot_dimension_numbers<[1], [0], [0], [1], [0, 0, 1, 1], [], []>} : vector<8x8xbf16>, vector<8x8xbf16>, vector<8x8xf32> -> vector<8x8xf32>
      %55 = arith.truncf %54 : vector<8x8xf32> to vector<8x8xbf16>
      %c0_31 = arith.constant 0 : index
      %c0_32 = arith.constant 0 : index
      %56 = vector.load %arg5[%c0_31, %c0_32] : memref<32x32xbf16, #tpu.memory_space<vmem>>, vector<8x32xbf16>
      %cst_33 = arith.constant dense<0.000000e+00> : vector<8x32xf32>
      %57 = tpu.matmul %55, %56, %cst_33 {dimension_numbers = #tpu.dot_dimension_numbers<[1], [0], [0], [1], [0, 0, 1, 1], [], []>} : vector<8x8xbf16>, vector<8x32xbf16>, vector<8x32xf32> -> vector<8x32xf32>
      %58 = arith.addf %36, %57 : vector<8x32xf32>
      %59 = vector.extract_strided_slice %29 {offsets = [0, 8], sizes = [8, 8], strides = [1, 1]} : vector<8x32xbf16> to vector<8x8xbf16>
      %60 = vector.extract_strided_slice %31 {offsets = [0, 8], sizes = [8, 8], strides = [1, 1]} : vector<8x32xbf16> to vector<8x8xbf16>
      %61 = vector.extract_strided_slice %33 {offsets = [0, 8], sizes = [8, 8], strides = [1, 1]} : vector<8x32xbf16> to vector<8x8xbf16>
      %cst_34 = arith.constant dense<0.000000e+00> : vector<8x8xf32>
      %62 = tpu.matmul %59, %60, %cst_34 {dimension_numbers = #tpu.dot_dimension_numbers<[1], [1], [0], [0], [0, 0, 1, 0], [], []>} : vector<8x8xbf16>, vector<8x8xbf16>, vector<8x8xf32> -> vector<8x8xf32>
      %cst_35 = arith.constant 0.353553385 : f32
      %63 = vector.broadcast %cst_35 : f32 to vector<8x8xf32>
      %64 = arith.mulf %62, %63 : vector<8x8xf32>
      %cst_36 = arith.constant dense<0xFF800000> : vector<8xf32>
      %65 = vector.multi_reduction <maximumf>, %64, %cst_36 [1] : vector<8x8xf32> to vector<8xf32>
      %66 = vector.shape_cast %65 : vector<8xf32> to vector<8x1xf32>
      %67 = vector.broadcast %66 : vector<8x1xf32> to vector<8x8xf32>
      %68 = arith.subf %64, %67 : vector<8x8xf32>
      %69 = math.exp %68 : vector<8x8xf32>
      %cst_37 = arith.constant dense<0.000000e+00> : vector<8xf32>
      %70 = vector.multi_reduction <add>, %69, %cst_37 [1] : vector<8x8xf32> to vector<8xf32>
      %71 = vector.shape_cast %70 : vector<8xf32> to vector<8x1xf32>
      %72 = tpu.reciprocal %71 {approx = true} : vector<8x1xf32> -> vector<8x1xf32>
      %73 = vector.broadcast %72 : vector<8x1xf32> to vector<8x8xf32>
      %74 = arith.mulf %69, %73 : vector<8x8xf32>
      %75 = arith.truncf %74 : vector<8x8xf32> to vector<8x8xbf16>
      %cst_38 = arith.constant dense<0.000000e+00> : vector<8x8xf32>
      %76 = tpu.matmul %75, %61, %cst_38 {dimension_numbers = #tpu.dot_dimension_numbers<[1], [0], [0], [1], [0, 0, 1, 1], [], []>} : vector<8x8xbf16>, vector<8x8xbf16>, vector<8x8xf32> -> vector<8x8xf32>
      %77 = arith.truncf %76 : vector<8x8xf32> to vector<8x8xbf16>
      %c8 = arith.constant 8 : index
      %c0_39 = arith.constant 0 : index
      %78 = vector.load %arg5[%c8, %c0_39] : memref<32x32xbf16, #tpu.memory_space<vmem>>, vector<8x32xbf16>
      %cst_40 = arith.constant dense<0.000000e+00> : vector<8x32xf32>
      %79 = tpu.matmul %77, %78, %cst_40 {dimension_numbers = #tpu.dot_dimension_numbers<[1], [0], [0], [1], [0, 0, 1, 1], [], []>} : vector<8x8xbf16>, vector<8x32xbf16>, vector<8x32xf32> -> vector<8x32xf32>
      %80 = arith.addf %58, %79 : vector<8x32xf32>
      %81 = vector.extract_strided_slice %29 {offsets = [0, 16], sizes = [8, 8], strides = [1, 1]} : vector<8x32xbf16> to vector<8x8xbf16>
      %82 = vector.extract_strided_slice %31 {offsets = [0, 16], sizes = [8, 8], strides = [1, 1]} : vector<8x32xbf16> to vector<8x8xbf16>
      %83 = vector.extract_strided_slice %33 {offsets = [0, 16], sizes = [8, 8], strides = [1, 1]} : vector<8x32xbf16> to vector<8x8xbf16>
      %cst_41 = arith.constant dense<0.000000e+00> : vector<8x8xf32>
      %84 = tpu.matmul %81, %82, %cst_41 {dimension_numbers = #tpu.dot_dimension_numbers<[1], [1], [0], [0], [0, 0, 1, 0], [], []>} : vector<8x8xbf16>, vector<8x8xbf16>, vector<8x8xf32> -> vector<8x8xf32>
      %cst_42 = arith.constant 0.353553385 : f32
      %85 = vector.broadcast %cst_42 : f32 to vector<8x8xf32>
      %86 = arith.mulf %84, %85 : vector<8x8xf32>
      %cst_43 = arith.constant dense<0xFF800000> : vector<8xf32>
      %87 = vector.multi_reduction <maximumf>, %86, %cst_43 [1] : vector<8x8xf32> to vector<8xf32>
      %88 = vector.shape_cast %87 : vector<8xf32> to vector<8x1xf32>
      %89 = vector.broadcast %88 : vector<8x1xf32> to vector<8x8xf32>
      %90 = arith.subf %86, %89 : vector<8x8xf32>
      %91 = math.exp %90 : vector<8x8xf32>
      %cst_44 = arith.constant dense<0.000000e+00> : vector<8xf32>
      %92 = vector.multi_reduction <add>, %91, %cst_44 [1] : vector<8x8xf32> to vector<8xf32>
      %93 = vector.shape_cast %92 : vector<8xf32> to vector<8x1xf32>
      %94 = tpu.reciprocal %93 {approx = true} : vector<8x1xf32> -> vector<8x1xf32>
      %95 = vector.broadcast %94 : vector<8x1xf32> to vector<8x8xf32>
      %96 = arith.mulf %91, %95 : vector<8x8xf32>
      %97 = arith.truncf %96 : vector<8x8xf32> to vector<8x8xbf16>
      %cst_45 = arith.constant dense<0.000000e+00> : vector<8x8xf32>
      %98 = tpu.matmul %97, %83, %cst_45 {dimension_numbers = #tpu.dot_dimension_numbers<[1], [0], [0], [1], [0, 0, 1, 1], [], []>} : vector<8x8xbf16>, vector<8x8xbf16>, vector<8x8xf32> -> vector<8x8xf32>
      %99 = arith.truncf %98 : vector<8x8xf32> to vector<8x8xbf16>
      %c16 = arith.constant 16 : index
      %c0_46 = arith.constant 0 : index
      %100 = vector.load %arg5[%c16, %c0_46] : memref<32x32xbf16, #tpu.memory_space<vmem>>, vector<8x32xbf16>
      %cst_47 = arith.constant dense<0.000000e+00> : vector<8x32xf32>
      %101 = tpu.matmul %99, %100, %cst_47 {dimension_numbers = #tpu.dot_dimension_numbers<[1], [0], [0], [1], [0, 0, 1, 1], [], []>} : vector<8x8xbf16>, vector<8x32xbf16>, vector<8x32xf32> -> vector<8x32xf32>
      %102 = arith.addf %80, %101 : vector<8x32xf32>
      %103 = vector.extract_strided_slice %29 {offsets = [0, 24], sizes = [8, 8], strides = [1, 1]} : vector<8x32xbf16> to vector<8x8xbf16>
      %104 = vector.extract_strided_slice %31 {offsets = [0, 24], sizes = [8, 8], strides = [1, 1]} : vector<8x32xbf16> to vector<8x8xbf16>
      %105 = vector.extract_strided_slice %33 {offsets = [0, 24], sizes = [8, 8], strides = [1, 1]} : vector<8x32xbf16> to vector<8x8xbf16>
      %cst_48 = arith.constant dense<0.000000e+00> : vector<8x8xf32>
      %106 = tpu.matmul %103, %104, %cst_48 {dimension_numbers = #tpu.dot_dimension_numbers<[1], [1], [0], [0], [0, 0, 1, 0], [], []>} : vector<8x8xbf16>, vector<8x8xbf16>, vector<8x8xf32> -> vector<8x8xf32>
      %cst_49 = arith.constant 0.353553385 : f32
      %107 = vector.broadcast %cst_49 : f32 to vector<8x8xf32>
      %108 = arith.mulf %106, %107 : vector<8x8xf32>
      %cst_50 = arith.constant dense<0xFF800000> : vector<8xf32>
      %109 = vector.multi_reduction <maximumf>, %108, %cst_50 [1] : vector<8x8xf32> to vector<8xf32>
      %110 = vector.shape_cast %109 : vector<8xf32> to vector<8x1xf32>
      %111 = vector.broadcast %110 : vector<8x1xf32> to vector<8x8xf32>
      %112 = arith.subf %108, %111 : vector<8x8xf32>
      %113 = math.exp %112 : vector<8x8xf32>
      %cst_51 = arith.constant dense<0.000000e+00> : vector<8xf32>
      %114 = vector.multi_reduction <add>, %113, %cst_51 [1] : vector<8x8xf32> to vector<8xf32>
      %115 = vector.shape_cast %114 : vector<8xf32> to vector<8x1xf32>
      %116 = tpu.reciprocal %115 {approx = true} : vector<8x1xf32> -> vector<8x1xf32>
      %117 = vector.broadcast %116 : vector<8x1xf32> to vector<8x8xf32>
      %118 = arith.mulf %113, %117 : vector<8x8xf32>
      %119 = arith.truncf %118 : vector<8x8xf32> to vector<8x8xbf16>
      %cst_52 = arith.constant dense<0.000000e+00> : vector<8x8xf32>
      %120 = tpu.matmul %119, %105, %cst_52 {dimension_numbers = #tpu.dot_dimension_numbers<[1], [0], [0], [1], [0, 0, 1, 1], [], []>} : vector<8x8xbf16>, vector<8x8xbf16>, vector<8x8xf32> -> vector<8x8xf32>
      %121 = arith.truncf %120 : vector<8x8xf32> to vector<8x8xbf16>
      %c24 = arith.constant 24 : index
      %c0_53 = arith.constant 0 : index
      %122 = vector.load %arg5[%c24, %c0_53] : memref<32x32xbf16, #tpu.memory_space<vmem>>, vector<8x32xbf16>
      %cst_54 = arith.constant dense<0.000000e+00> : vector<8x32xf32>
      %123 = tpu.matmul %121, %122, %cst_54 {dimension_numbers = #tpu.dot_dimension_numbers<[1], [0], [0], [1], [0, 0, 1, 1], [], []>} : vector<8x8xbf16>, vector<8x32xbf16>, vector<8x32xf32> -> vector<8x32xf32>
      %124 = arith.addf %102, %123 : vector<8x32xf32>
      %125 = arith.truncf %124 : vector<8x32xf32> to vector<8x32xbf16>
      %c0_55 = arith.constant 0 : index
      %c0_56 = arith.constant 0 : index
      %126 = vector.load %arg12[%c0_55, %c0_56] : memref<8x32xbf16, #tpu.memory_space<vmem>>, vector<8x32xbf16>
      tpu.vector_store %arg12[%c0_55, %c0_56], %125 {strides = array<i32>} : memref<8x32xbf16, #tpu.memory_space<vmem>>, vector<8x32xbf16>,
      %c0_57 = arith.constant 0 : index
      %c0_58 = arith.constant 0 : index
      %127 = vector.load %arg10[%c0_57, %c0_58] : memref<1x32xf32, #tpu.memory_space<vmem>>, vector<1x32xf32>
      %128 = vector.broadcast %127 : vector<1x32xf32> to vector<8x32xf32>
      %129 = arith.addf %124, %128 : vector<8x32xf32>
      %c0_59 = arith.constant 0 : index
      %c0_60 = arith.constant 0 : index
      %130 = vector.load %arg13[%c0_59, %c0_60] : memref<8x32xf32, #tpu.memory_space<vmem>>, vector<8x32xf32>
      tpu.vector_store %arg13[%c0_59, %c0_60], %129 {strides = array<i32>} : memref<8x32xf32, #tpu.memory_space<vmem>>, vector<8x32xf32>,
    } else {
    }
    %c0 = arith.constant 0 : index
    %c0_1 = arith.constant 0 : index
    %3 = vector.load %arg12[%c0, %c0_1] : memref<8x32xbf16, #tpu.memory_space<vmem>>, vector<8x32xbf16>
    %c0_2 = arith.constant 0 : index
    %c0_3 = arith.constant 0 : index
    %4 = vector.load %arg7[%c0_2, %c0_3] : memref<32x64xbf16, #tpu.memory_space<vmem>>, vector<32x64xbf16>
    %cst = arith.constant dense<0.000000e+00> : vector<8x64xf32>
    %5 = tpu.matmul %3, %4, %cst {dimension_numbers = #tpu.dot_dimension_numbers<[1], [0], [0], [1], [0, 0, 1, 1], [], []>} : vector<8x32xbf16>, vector<32x64xbf16>, vector<8x64xf32> -> vector<8x64xf32>
    %c0_4 = arith.constant 0 : index
    %c0_5 = arith.constant 0 : index
    %6 = vector.load %arg8[%c0_4, %c0_5] : memref<1x64xf32, #tpu.memory_space<vmem>>, vector<1x64xf32>
    %7 = vector.broadcast %6 : vector<1x64xf32> to vector<8x64xf32>
    %8 = arith.addf %5, %7 : vector<8x64xf32>
    %cst_6 = arith.constant 0.000000e+00 : f32
    %9 = vector.broadcast %cst_6 : f32 to vector<8x64xf32>
    %10 = arith.maximumf %8, %9 : vector<8x64xf32>
    %c0_7 = arith.constant 0 : index
    %c0_8 = arith.constant 0 : index
    %11 = vector.load %arg13[%c0_7, %c0_8] : memref<8x32xf32, #tpu.memory_space<vmem>>, vector<8x32xf32>
    %12 = arith.truncf %10 : vector<8x64xf32> to vector<8x64xbf16>
    %c0_9 = arith.constant 0 : index
    %c0_10 = arith.constant 0 : index
    %13 = vector.load %arg9[%c0_9, %c0_10] : memref<64x32xbf16, #tpu.memory_space<vmem>>, vector<64x32xbf16>
    %cst_11 = arith.constant dense<0.000000e+00> : vector<8x32xf32>
    %14 = tpu.matmul %12, %13, %cst_11 {dimension_numbers = #tpu.dot_dimension_numbers<[1], [0], [0], [1], [0, 0, 1, 1], [], []>} : vector<8x64xbf16>, vector<64x32xbf16>, vector<8x32xf32> -> vector<8x32xf32>
    %15 = arith.addf %11, %14 : vector<8x32xf32>
    %c0_12 = arith.constant 0 : index
    %c0_13 = arith.constant 0 : index
    %16 = vector.load %arg13[%c0_12, %c0_13] : memref<8x32xf32, #tpu.memory_space<vmem>>, vector<8x32xf32>
    tpu.vector_store %arg13[%c0_12, %c0_13], %15 {strides = array<i32>} : memref<8x32xf32, #tpu.memory_space<vmem>>, vector<8x32xf32>,
    %c0_i32_14 = arith.constant 0 : i32
    %17 = arith.cmpi eq, %arg1, %c0_i32_14 : i32
    %18 = arith.extui %17 : i1 to i32
    %c0_i32_15 = arith.constant 0 : i32
    %19 = arith.cmpi ne, %18, %c0_i32_15 : i32
    scf.if %19 {
      %c0_16 = arith.constant 0 : index
      %c0_17 = arith.constant 0 : index
      %20 = vector.load %arg13[%c0_16, %c0_17] : memref<8x32xf32, #tpu.memory_space<vmem>>, vector<8x32xf32>
      %c0_18 = arith.constant 0 : index
      %c0_19 = arith.constant 0 : index
      %c0_20 = arith.constant 0 : index
      %21 = vector.load %arg11[%c0_18, %c0_19, %c0_20] : memref<1x8x32xf32, #tpu.memory_space<vmem>>, vector<1x8x32xf32>
      %22 = vector.shape_cast %21 : vector<1x8x32xf32> to vector<8x32xf32>
      %23 = vector.shape_cast %20 : vector<8x32xf32> to vector<1x8x32xf32>
      tpu.vector_store %arg11[%c0_18, %c0_19, %c0_20], %23 {strides = array<i32>} : memref<1x8x32xf32, #tpu.memory_space<vmem>>, vector<1x8x32xf32>,
    } else {
    }
    return
  }
  func.func @transform_0(%arg0: i32, %arg1: i32) -> (i32, i32, i32) {
    %c0_i32 = arith.constant 0 : i32
    %c0_i32_0 = arith.constant 0 : i32
    %c0_i32_1 = arith.constant 0 : i32
    return %arg0, %c0_i32, %c0_i32_0 : i32, i32, i32
  }
  func.func @transform_1(%arg0: i32, %arg1: i32) -> (i32, i32) {
    %c0_i32 = arith.constant 0 : i32
    %c0_i32_0 = arith.constant 0 : i32
    %c0_i32_1 = arith.constant 0 : i32
    return %c0_i32, %c0_i32_0 : i32, i32
  }
  func.func @transform_2(%arg0: i32, %arg1: i32) -> (i32, i32) {
    %c0_i32 = arith.constant 0 : i32
    %c0_i32_0 = arith.constant 0 : i32
    %c0_i32_1 = arith.constant 0 : i32
    return %c0_i32, %c0_i32_0 : i32, i32
  }
  func.func @transform_3(%arg0: i32, %arg1: i32) -> (i32, i32) {
    %c0_i32 = arith.constant 0 : i32
    %c0_i32_0 = arith.constant 0 : i32
    %c0_i32_1 = arith.constant 0 : i32
    return %c0_i32, %c0_i32_0 : i32, i32
  }
  func.func @transform_4(%arg0: i32, %arg1: i32) -> (i32, i32) {
    %c0_i32 = arith.constant 0 : i32
    %c0_i32_0 = arith.constant 0 : i32
    %c0_i32_1 = arith.constant 0 : i32
    return %c0_i32, %c0_i32_0 : i32, i32
  }
  func.func @transform_5(%arg0: i32, %arg1: i32) -> (i32, i32) {
    %c0_i32 = arith.constant 0 : i32
    %c0_i32_0 = arith.constant 0 : i32
    return %c0_i32, %arg1 : i32, i32
  }
  func.func @transform_6(%arg0: i32, %arg1: i32) -> (i32, i32) {
    %c0_i32 = arith.constant 0 : i32
    %c0_i32_0 = arith.constant 0 : i32
    return %c0_i32, %arg1 : i32, i32
  }
  func.func @transform_7(%arg0: i32, %arg1: i32) -> (i32, i32) {
    %c0_i32 = arith.constant 0 : i32
    %c0_i32_0 = arith.constant 0 : i32
    return %arg1, %c0_i32 : i32, i32
  }
  func.func @transform_8(%arg0: i32, %arg1: i32) -> (i32, i32) {
    %c0_i32 = arith.constant 0 : i32
    %c0_i32_0 = arith.constant 0 : i32
    %c0_i32_1 = arith.constant 0 : i32
    return %c0_i32, %c0_i32_0 : i32, i32
  }
  func.func @transform_9(%arg0: i32, %arg1: i32) -> (i32, i32, i32) {
    %c0_i32 = arith.constant 0 : i32
    %c0_i32_0 = arith.constant 0 : i32
    %c0_i32_1 = arith.constant 0 : i32
    return %arg0, %c0_i32, %c0_i32_0 : i32, i32, i32
  }
}

</mosaic_0001>

<llo_original>
// kernel: tpu_custom_call.1
$region0: #{tpu_custom_call.1}
  #allocation0 [shape = 'u32[]', space=smem, size = 0x4, offset = 0x4, fixed_abs, tag = 'smem constant byte address 0x4 - core index']
  #allocation1 [shape = 'u32[144,128]{1,0:T(1,128)}', space=vmem, size = 0x12000, scoped, tag = 'internal scratch']
  #allocation2 [shape = 'bf16[8,32]{1,0:T(8,128)(2,1)}', space=vmem, size = 0x800, scoped, tag = 'scratch operand']
  #allocation3 [shape = 'f32[8,32]{1,0:T(8,128)}', space=vmem, size = 0x1000, scoped, tag = 'scratch operand']
  %s0 = inlined_call_operand.vmem [shape: f32[2,8,32], index: 0, kind: input, shape index: {}]
  %s1 = inlined_call_operand.vmem [shape: bf16[32,96], index: 1, kind: input, shape index: {}]
  %s2 = inlined_call_operand.vmem [shape: f32[1,96], index: 2, kind: input, shape index: {}]
  %s3 = inlined_call_operand.vmem [shape: bf16[32,32], index: 3, kind: input, shape index: {}]
  %s4 = inlined_call_operand.vmem [shape: f32[1,32], index: 4, kind: input, shape index: {}]
  %s5 = inlined_call_operand.hbm [shape: bf16[32,64], index: 5, kind: input, shape index: {}]
  %s6 = inlined_call_operand.vmem [shape: f32[1,64], index: 6, kind: input, shape index: {}]
  %s7 = inlined_call_operand.vmem [shape: bf16[64,32], index: 7, kind: input, shape index: {}]
  %s8 = inlined_call_operand.vmem [shape: f32[1,32], index: 8, kind: input, shape index: {}]
  %s9 = inlined_call_operand.hbm [shape: f32[2,8,32], index: 9, kind: output, shape index: {}]
  %s10 = sld [smem:[#allocation0]]
  $region81: #{tpu_custom_call.1} parent=0
    _
  %s12 = ssub.s32 1, %s10
  %s13 = scalar_select 0, %s12, %s10
  $region1: #{tpu_custom_call.1} parent=0
    #allocation4 [shape = 'u8[8192]{0}', space=vmem, size = 0x2000, scoped, tag = 'input window, operand 5, single buffered']
    #allocation5 [shape = 's32[2]{0}', space=sflag, size = 0x8, scoped, tag = 'scoped memory for tpu_custom_call.1']
    #allocation6 [shape = 's32[2]{0}', space=sflag, size = 0x8, scoped, tag = 'scoped memory for tpu_custom_call.1']
    #allocation7 [shape = 'u8[8192]{0}', space=vmem, size = 0x2000, scoped, tag = 'output window, operand 0']
    %14 = vsyncpa [#allocation5], 0
    %15 = vsyncpa [#allocation6], 0
    %s16 = scalar_lea.sflag [#allocation6], 1
    %17 = vsyncpa %s16, 0
    loop: start=0, step=1, limit=4
    $region2: #{tpu_custom_call.1} parent=1 // loop_pre_header
      _
    $region3: #{tpu_custom_call.1} parent=1 // loop_header
      %s19 = sphi 0, %s23
      %p20 = scmp.ge.s32.totalorder %s19, 4
      %s26 = sphi 0, %s38
      %s27 = sphi 0, %s34
      %s28 = sphi 0, %s26
      %s29 = sphi 0, %s27
      %s30 = sphi 0, %s28
      %s31 = sphi 0, %s29
      %s41 = sphi 0, %s43
      %s44 = sphi 0, %s41
      %s45 = sphi 0, %s44
      %s61 = sphi 0, %s45
      %s65 = sphi 0, %s65
      %s67 = sphi 0, %s65
      %s68 = sphi 0, %s67
      %s82 = sphi 0, %s68
      %s86 = sphi 0, %s86
      %s88 = sphi 0, %s86
      %s89 = sphi 0, %s88
      %s103 = sphi 0, %s89
      %s107 = sphi 0, %s107
      %s109 = sphi 0, %s107
      %s110 = sphi 0, %s109
      %s124 = sphi 0, %s110
      %s128 = sphi 0, %s128
      %s130 = sphi 0, %s128
      %s131 = sphi 0, %s130
      %s145 = sphi 0, %s131
      %s151 = sphi 0, %s153
      %s154 = sphi 0, %s151
      %s155 = sphi 0, %s154
      %s171 = sphi 0, %s155
      %s177 = sphi 0, %s179
      %s180 = sphi 0, %s177
      %s181 = sphi 0, %s180
      %s197 = sphi 0, %s181
      %s203 = sphi 0, %s205
      %s206 = sphi 0, %s203
      %s207 = sphi 0, %s206
      %s223 = sphi 0, %s207
      %s227 = sphi 0, %s227
      %s229 = sphi 0, %s227
      %s230 = sphi 0, %s229
      %s244 = sphi 0, %s230
      %s250 = sphi 0, %s252
      %s253 = sphi 0, %s250
      %s254 = sphi 0, %s253
      %s270 = sphi 0, %s254
    $region4: #{tpu_custom_call.1} parent=1 // loop_header_branch
      %22 = sbr.rel (%p20) target = $region8
    $region5: #{tpu_custom_call.1} parent=1 // loop_body
      %s24 = ssub.s32 %s19, 1
      %s25 = ssub.s32 %s19, 2
      %s32 = sadd.s32 1, %s27
      %p33 = scmp.ge.s32.totalorder %s32, 1
      %s34 = scalar_select %p33, 0, %s32
      %s35 = sadd.s32 1, %s26
      %s36 = scalar_select %p33, %s35, %s26
      %p37 = scmp.ge.s32.totalorder %s36, 2
      %s38 = scalar_select %p37, 0, %s36
      %s39 = ssub.s32 %s26, %s38
      %p40 = scmp.eq.s32.totalorder %s39, 0
      %s42 = sadd.s32 %s41, 1
      %s43 = scalar_select %p40, %s41, %s42
      %p46 = pneg %p40
      %p47 = scmp.eq.s32.totalorder %s19, 1
      %p48 = por %p46, %p47
      %p49 = scmp.ne.s32.totalorder %s41, %s44
      %p50 = scmp.eq.s32.totalorder %s19, 0
      %p51 = por %p49, %p50
      %p52 = scmp.ne.s32.totalorder %s41, %s44
      %p53 = scmp.eq.s32.totalorder %s24, 1
      %p54 = por %p52, %p53
      %p55 = scmp.ne.s32.totalorder %s44, %s45
      %p56 = scmp.eq.s32.totalorder %s24, 0
      %p57 = por %p55, %p56
      %p58 = scmp.ne.s32.totalorder %s44, %s45
      %p59 = scmp.eq.s32.totalorder %s25, 1
      %p60 = por %p58, %p59
      %p62 = scmp.ne.s32.totalorder %s45, %s61
      %p63 = scmp.eq.s32.totalorder %s25, 0
      %p64 = por %p62, %p63
      %s66 = sadd.s32 %s65, 1
      %p69 = scmp.eq.s32.totalorder %s19, 1
      %p70 = scmp.ne.s32.totalorder %s65, %s67
      %p71 = scmp.eq.s32.totalorder %s19, 0
      %p72 = por %p70, %p71
      %p73 = scmp.ne.s32.totalorder %s65, %s67
      %p74 = scmp.eq.s32.totalorder %s24, 1
      %p75 = por %p73, %p74
      %p76 = scmp.ne.s32.totalorder %s67, %s68
      %p77 = scmp.eq.s32.totalorder %s24, 0
      %p78 = por %p76, %p77
      %p79 = scmp.ne.s32.totalorder %s67, %s68
      %p80 = scmp.eq.s32.totalorder %s25, 1
      %p81 = por %p79, %p80
      %p83 = scmp.ne.s32.totalorder %s68, %s82
      %p84 = scmp.eq.s32.totalorder %s25, 0
      %p85 = por %p83, %p84
      %s87 = sadd.s32 %s86, 1
      %p90 = scmp.eq.s32.totalorder %s19, 1
      %p91 = scmp.ne.s32.totalorder %s86, %s88
      %p92 = scmp.eq.s32.totalorder %s19, 0
      %p93 = por %p91, %p92
      %p94 = scmp.ne.s32.totalorder %s86, %s88
      %p95 = scmp.eq.s32.totalorder %s24, 1
      %p96 = por %p94, %p95
      %p97 = scmp.ne.s32.totalorder %s88, %s89
      %p98 = scmp.eq.s32.totalorder %s24, 0
      %p99 = por %p97, %p98
      %p100 = scmp.ne.s32.totalorder %s88, %s89
      %p101 = scmp.eq.s32.totalorder %s25, 1
      %p102 = por %p100, %p101
      %p104 = scmp.ne.s32.totalorder %s89, %s103
      %p105 = scmp.eq.s32.totalorder %s25, 0
      %p106 = por %p104, %p105
      %s108 = sadd.s32 %s107, 1
      %p111 = scmp.eq.s32.totalorder %s19, 1
      %p112 = scmp.ne.s32.totalorder %s107, %s109
      %p113 = scmp.eq.s32.totalorder %s19, 0
      %p114 = por %p112, %p113
      %p115 = scmp.ne.s32.totalorder %s107, %s109
      %p116 = scmp.eq.s32.totalorder %s24, 1
      %p117 = por %p115, %p116
      %p118 = scmp.ne.s32.totalorder %s109, %s110
      %p119 = scmp.eq.s32.totalorder %s24, 0
      %p120 = por %p118, %p119
      %p121 = scmp.ne.s32.totalorder %s109, %s110
      %p122 = scmp.eq.s32.totalorder %s25, 1
      %p123 = por %p121, %p122
      %p125 = scmp.ne.s32.totalorder %s110, %s124
      %p126 = scmp.eq.s32.totalorder %s25, 0
      %p127 = por %p125, %p126
      %s129 = sadd.s32 %s128, 1
      %p132 = scmp.eq.s32.totalorder %s19, 1
      %p133 = scmp.ne.s32.totalorder %s128, %s130
      %p134 = scmp.eq.s32.totalorder %s19, 0
      %p135 = por %p133, %p134
      %p136 = scmp.ne.s32.totalorder %s128, %s130
      %p137 = scmp.eq.s32.totalorder %s24, 1
      %p138 = por %p136, %p137
      %p139 = scmp.ne.s32.totalorder %s130, %s131
      %p140 = scmp.eq.s32.totalorder %s24, 0
      %p141 = por %p139, %p140
      %p142 = scmp.ne.s32.totalorder %s130, %s131
      %p143 = scmp.eq.s32.totalorder %s25, 1
      %p144 = por %p142, %p143
      %p146 = scmp.ne.s32.totalorder %s131, %s145
      %p147 = scmp.eq.s32.totalorder %s25, 0
      %p148 = por %p146, %p147
      %s149 = ssub.s32 %s27, %s34
      %p150 = scmp.eq.s32.totalorder %s149, 0
      %s152 = sadd.s32 %s151, 1
      %s153 = scalar_select %p150, %s151, %s152
      %p156 = pneg %p150
      %p157 = scmp.eq.s32.totalorder %s19, 1
      %p158 = por %p156, %p157
      %p159 = scmp.ne.s32.totalorder %s151, %s154
      %p160 = scmp.eq.s32.totalorder %s19, 0
      %p161 = por %p159, %p160
      %p162 = scmp.ne.s32.totalorder %s151, %s154
      %p163 = scmp.eq.s32.totalorder %s24, 1
      %p164 = por %p162, %p163
      %p165 = scmp.ne.s32.totalorder %s154, %s155
      %p166 = scmp.eq.s32.totalorder %s24, 0
      %p167 = por %p165, %p166
      %p168 = scmp.ne.s32.totalorder %s154, %s155
      %p169 = scmp.eq.s32.totalorder %s25, 1
      %p170 = por %p168, %p169
      %p172 = scmp.ne.s32.totalorder %s155, %s171
      %p173 = scmp.eq.s32.totalorder %s25, 0
      %p174 = por %p172, %p173
      %s175 = ssub.s32 %s27, %s34
      %p176 = scmp.eq.s32.totalorder %s175, 0
      %s178 = sadd.s32 %s177, 1
      %s179 = scalar_select %p176, %s177, %s178
      %p182 = pneg %p176
      %p183 = scmp.eq.s32.totalorder %s19, 1
      %p184 = por %p182, %p183
      %p185 = scmp.ne.s32.totalorder %s177, %s180
      %p186 = scmp.eq.s32.totalorder %s19, 0
      %p187 = por %p185, %p186
      %p188 = scmp.ne.s32.totalorder %s177, %s180
      %p189 = scmp.eq.s32.totalorder %s24, 1
      %p190 = por %p188, %p189
      %p191 = scmp.ne.s32.totalorder %s180, %s181
      %p192 = scmp.eq.s32.totalorder %s24, 0
      %p193 = por %p191, %p192
      %p194 = scmp.ne.s32.totalorder %s180, %s181
      %p195 = scmp.eq.s32.totalorder %s25, 1
      %p196 = por %p194, %p195
      %p198 = scmp.ne.s32.totalorder %s181, %s197
      %p199 = scmp.eq.s32.totalorder %s25, 0
      %p200 = por %p198, %p199
      %s201 = ssub.s32 %s27, %s34
      %p202 = scmp.eq.s32.totalorder %s201, 0
      %s204 = sadd.s32 %s203, 1
      %s205 = scalar_select %p202, %s203, %s204
      %p208 = pneg %p202
      %p209 = scmp.eq.s32.totalorder %s19, 1
      %p210 = por %p208, %p209
      %p211 = scmp.ne.s32.totalorder %s203, %s206
      %p212 = scmp.eq.s32.totalorder %s19, 0
      %p213 = por %p211, %p212
      %p214 = scmp.ne.s32.totalorder %s203, %s206
      %p215 = scmp.eq.s32.totalorder %s24, 1
      %p216 = por %p214, %p215
      %p217 = scmp.ne.s32.totalorder %s206, %s207
      %p218 = scmp.eq.s32.totalorder %s24, 0
      %p219 = por %p217, %p218
      %p220 = scmp.ne.s32.totalorder %s206, %s207
      %p221 = scmp.eq.s32.totalorder %s25, 1
      %p222 = por %p220, %p221
      %p224 = scmp.ne.s32.totalorder %s207, %s223
      %p225 = scmp.eq.s32.totalorder %s25, 0
      %p226 = por %p224, %p225
      %s228 = sadd.s32 %s227, 1
      %p231 = scmp.eq.s32.totalorder %s19, 1
      %p232 = scmp.ne.s32.totalorder %s227, %s229
      %p233 = scmp.eq.s32.totalorder %s19, 0
      %p234 = por %p232, %p233
      %p235 = scmp.ne.s32.totalorder %s227, %s229
      %p236 = scmp.eq.s32.totalorder %s24, 1
      %p237 = por %p235, %p236
      %p238 = scmp.ne.s32.totalorder %s229, %s230
      %p239 = scmp.eq.s32.totalorder %s24, 0
      %p240 = por %p238, %p239
      %p241 = scmp.ne.s32.totalorder %s229, %s230
      %p242 = scmp.eq.s32.totalorder %s25, 1
      %p243 = por %p241, %p242
      %p245 = scmp.ne.s32.totalorder %s230, %s244
      %p246 = scmp.eq.s32.totalorder %s25, 0
      %p247 = por %p245, %p246
      %s248 = ssub.s32 %s26, %s38
      %p249 = scmp.eq.s32.totalorder %s248, 0
      %s251 = sadd.s32 %s250, 1
      %s252 = scalar_select %p249, %s250, %s251
      %p255 = pneg %p249
      %p256 = scmp.eq.s32.totalorder %s19, 1
      %p257 = por %p255, %p256
      %p258 = scmp.ne.s32.totalorder %s250, %s253
      %p259 = scmp.eq.s32.totalorder %s19, 0
      %p260 = por %p258, %p259
      %p261 = scmp.ne.s32.totalorder %s250, %s253
      %p262 = scmp.eq.s32.totalorder %s24, 1
      %p263 = por %p261, %p262
      %p264 = scmp.ne.s32.totalorder %s253, %s254
      %p265 = scmp.eq.s32.totalorder %s24, 0
      %p266 = por %p264, %p265
      %p267 = scmp.ne.s32.totalorder %s253, %s254
      %p268 = scmp.eq.s32.totalorder %s25, 1
      %p269 = por %p267, %p268
      %p271 = scmp.ne.s32.totalorder %s254, %s270
      %p272 = scmp.eq.s32.totalorder %s25, 0
      %p273 = por %p271, %p272
      %p274 = scmp.le.s32.totalorder 1, %s19
      %p275 = scmp.lt.s32.totalorder %s19, 3
      %p276 = pnand %p274, %p275
      %p277 = pneg %p276
      // Predicated region
      $region9: #{tpu_custom_call.1} parent=5 // pred_check
        _
      $region10: #{tpu_custom_call.1} parent=5 // pred_check_branch
        %279 = sbr.rel (%p276) target = $region12
      $region11: #{tpu_custom_call.1} parent=5 // pred_region
        %s280 = ssub.s32 %s19, 1
        // Predicated region
        $region13: #{tpu_custom_call.1} parent=11 // pred_check
          %p281 = pneg %p78
        $region14: #{tpu_custom_call.1} parent=11 // pred_check_branch
          %283 = sbr.rel (%p281) target = $region16
        $region15: #{tpu_custom_call.1} parent=11 // pred_region
          _
        $region16: #{tpu_custom_call.1} parent=11 // pred_fallthru
          _
        // Predicated region
        $region17: #{tpu_custom_call.1} parent=11 // pred_check
          %p284 = pneg %p99
        $region18: #{tpu_custom_call.1} parent=11 // pred_check_branch
          %286 = sbr.rel (%p284) target = $region20
        $region19: #{tpu_custom_call.1} parent=11 // pred_region
          _
        $region20: #{tpu_custom_call.1} parent=11 // pred_fallthru
          _
        // Predicated region
        $region21: #{tpu_custom_call.1} parent=11 // pred_check
          %p287 = pneg %p120
        $region22: #{tpu_custom_call.1} parent=11 // pred_check_branch
          %289 = sbr.rel (%p287) target = $region24
        $region23: #{tpu_custom_call.1} parent=11 // pred_region
          _
        $region24: #{tpu_custom_call.1} parent=11 // pred_fallthru
          _
        // Predicated region
        $region25: #{tpu_custom_call.1} parent=11 // pred_check
          %p290 = pneg %p141
        $region26: #{tpu_custom_call.1} parent=11 // pred_check_branch
          %292 = sbr.rel (%p290) target = $region28
        $region27: #{tpu_custom_call.1} parent=11 // pred_region
          _
        $region28: #{tpu_custom_call.1} parent=11 // pred_fallthru
          _
        // Predicated region
        $region29: #{tpu_custom_call.1} parent=11 // pred_check
          %p293 = pneg %p167
        $region30: #{tpu_custom_call.1} parent=11 // pred_check_branch
          %295 = sbr.rel (%p293) target = $region32
        $region31: #{tpu_custom_call.1} parent=11 // pred_region
          %s297 = ssub.s32 256, 256
          %298 = vsyncadd [#allocation5], %s297
          %s299 = smul.addr %s29, 64
          %s300 = scalar_lea.hbm %s5, %s299
          %s301 = sshll.u32 [#allocation4], 4
          %s302 = int_to_ptr.vmem [resolvable:$true] %s301
          %307 = dma.hbm_to_vmem [thread:$0]  %s300, 256, %s302, [#allocation5], 64, 64, 4
        $region32: #{tpu_custom_call.1} parent=11 // pred_fallthru
          _
        // Predicated region
        $region33: #{tpu_custom_call.1} parent=11 // pred_check
          %p308 = pneg %p193
        $region34: #{tpu_custom_call.1} parent=11 // pred_check_branch
          %310 = sbr.rel (%p308) target = $region36
        $region35: #{tpu_custom_call.1} parent=11 // pred_region
          %p311 = scmp.lt.s32.totalorder %s29, 0
          %s312 = scalar_select %p311, %s29, 0
          %s313 = scalar_lea.vmem %s6, %s312
        $region36: #{tpu_custom_call.1} parent=11 // pred_fallthru
          _
        // Predicated region
        $region37: #{tpu_custom_call.1} parent=11 // pred_check
          %p314 = pneg %p219
        $region38: #{tpu_custom_call.1} parent=11 // pred_check_branch
          %316 = sbr.rel (%p314) target = $region40
        $region39: #{tpu_custom_call.1} parent=11 // pred_region
          %s317 = smul.u32 8, %s29
          %p318 = scmp.lt.s32.totalorder %s317, 7
          %s319 = scalar_select %p318, %s317, 7
          %s320 = smul.addr %s319, 4
          %s321 = scalar_lea.vmem %s7, %s320
          %s322 = smul.u32 8, %s29
        $region40: #{tpu_custom_call.1} parent=11 // pred_fallthru
          _
        // Predicated region
        $region41: #{tpu_custom_call.1} parent=11 // pred_check
          %p323 = pneg %p240
        $region42: #{tpu_custom_call.1} parent=11 // pred_check_branch
          %325 = sbr.rel (%p323) target = $region44
        $region43: #{tpu_custom_call.1} parent=11 // pred_region
          _
        $region44: #{tpu_custom_call.1} parent=11 // pred_fallthru
          _
      $region12: #{tpu_custom_call.1} parent=5 // pred_fallthru
        _
      %p326 = scmp.lt.s32.totalorder %s19, 2
      // Predicated region
      $region45: #{tpu_custom_call.1} parent=5 // pred_check
        %p327 = pneg %p326
      $region46: #{tpu_custom_call.1} parent=5 // pred_check_branch
        %329 = sbr.rel (%p327) target = $region48
      $region47: #{tpu_custom_call.1} parent=5 // pred_region
        // Predicated region
        $region49: #{tpu_custom_call.1} parent=47 // pred_check
          %p330 = pneg %p51
        $region50: #{tpu_custom_call.1} parent=47 // pred_check_branch
          %332 = sbr.rel (%p330) target = $region52
        $region51: #{tpu_custom_call.1} parent=47 // pred_region
          %p333 = scmp.lt.s32.totalorder %s26, 1
          %s334 = scalar_select %p333, %s26, 1
          %s335 = smul.addr %s334, 8
          %s336 = scalar_lea.vmem %s0, %s335
        $region52: #{tpu_custom_call.1} parent=47 // pred_fallthru
          _
      $region48: #{tpu_custom_call.1} parent=5 // pred_fallthru
        _
      %p337 = scmp.le.s32.totalorder 1, %s19
      %p338 = scmp.lt.s32.totalorder %s19, 3
      %p339 = pnand %p337, %p338
      %p340 = pneg %p339
      // Predicated region
      $region53: #{tpu_custom_call.1} parent=5 // pred_check
        _
      $region54: #{tpu_custom_call.1} parent=5 // pred_check_branch
        %342 = sbr.rel (%p339) target = $region56
      $region55: #{tpu_custom_call.1} parent=5 // pred_region
        %s343 = ssub.s32 %s19, 1
        // Predicated region
        $region57: #{tpu_custom_call.1} parent=55 // pred_check
          %p344 = pneg %p167
        $region58: #{tpu_custom_call.1} parent=55 // pred_check_branch
          %346 = sbr.rel (%p344) target = $region60
        $region59: #{tpu_custom_call.1} parent=55 // pred_region
          %347 = dma.done [#allocation5], 256
        $region60: #{tpu_custom_call.1} parent=55 // pred_fallthru
          _
        %p348 = scmp.lt.s32.totalorder %s28, 1
        %s349 = scalar_select %p348, %s28, 1
        %s350 = smul.addr %s349, 8
        %s351 = scalar_lea.vmem %s0, %s350
        %p352 = pneg %p57
        %p353 = pneg %p54
        %p354 = pneg %p78
        %p355 = pneg %p75
        %p356 = pneg %p99
        %p357 = pneg %p96
        %p358 = pneg %p120
        %p359 = pneg %p117
        %p360 = pneg %p141
        %p361 = pneg %p138
        %p362 = pneg %p167
        %p363 = pneg %p164
        %p364 = scmp.lt.s32.totalorder %s29, 0
        %s365 = scalar_select %p364, %s29, 0
        %s366 = scalar_lea.vmem %s6, %s365
        %p367 = pneg %p193
        %p368 = pneg %p190
        %s369 = smul.u32 8, %s29
        %p370 = scmp.lt.s32.totalorder %s369, 7
        %s371 = scalar_select %p370, %s369, 7
        %s372 = smul.addr %s371, 4
        %s373 = scalar_lea.vmem %s7, %s372
        %p374 = pneg %p219
        %p375 = pneg %p216
        %p376 = pneg %p240
        %p377 = pneg %p237
        %p378 = pneg %p266
        %p379 = pneg %p263
        %s380 = sand.u32 %s253, 1
        %s381 = scalar_lea.sflag [#allocation6], %s380
        %s382 = sand.u32 %s253, 1
        %s383 = smul.addr %s382, 8
        %s384 = scalar_lea.vmem [#allocation7], %s383
        %p385 = scmp.lt.s32.totalorder %s28, 1
        %s386 = scalar_select %p385, %s28, 1
        %s387 = smul.addr %s386, 8
        %s388 = scalar_lea.vmem %s0, %s387
        %p389 = scmp.lt.s32.totalorder %s29, 0
        %s390 = scalar_select %p389, %s29, 0
        %s391 = scalar_lea.vmem %s6, %s390
        %s392 = smul.u32 8, %s29
        %p393 = scmp.lt.s32.totalorder %s392, 7
        %s394 = scalar_select %p393, %s392, 7
        %s395 = smul.addr %s394, 4
        %s396 = scalar_lea.vmem %s7, %s395
        %s397 = smul.u32 8, %s29
        %p399 = scmp.eq.s32.totalorder %s29, 0
        // Predicated region
        $region61: #{tpu_custom_call.1} parent=55 // pred_check
          %p400 = pneg %p399
        $region62: #{tpu_custom_call.1} parent=55 // pred_check_branch
          %402 = sbr.rel (%p400) target = $region64
        $region63: #{tpu_custom_call.1} parent=55 // pred_region
          %v403 = vld [vmem:[%s388] sm:$0xff]
          %v404 = vpack.c.bf16 %v403, %v403
          %v405 = vld [vmem:[%s1] sm:$0xf]
          %v406 = vld [vmem:[%s1 + $0x4] sm:$0xf]
          %v407 = vld [vmem:[%s1 + $0x8] sm:$0xf]
          %v408 = vld [vmem:[%s1 + $0xc] sm:$0xf]
          %v409 = vld [vmem:[%s2] sm:$0x1]
          %v411 = vlaneseq
          %v412 = vshrl.u32 %v411, 7
          %v413 = vsub.s32 0, %v412
          %v414 = vrot.slane %v409, %v413
          %v420 = vunpack.c.l.b16 %v405
          %v421 = vunpack.c.l.b16 %v406
          %v422 = vunpack.c.l.b16 %v407
          %v423 = vunpack.c.l.b16 %v408
          %v424 = vpack.c.b16 %v421, %v420
          %v425 = vpack.c.b16 %v423, %v422
          %vm428 = vcmask 261120
          %v430 = vsel %vm428, %v404, 0
          %432 = vmatprep.subr.bf16.mxu0 0
          %433 = vmatpush1.bf16.msra.mxu0 %v424
          %434 = vmatprep.subr.bf16.mxu0 0
          %435 = vmatpush1.bf16.msra.mxu0 %v425
          %436 = vmatprep.subr.bf16.mxu0 0
          %437 = vmatpush1.bf16.msra.mxu0 0
          %438 = vmatprep.subr.bf16.mxu0 0
          %439 = vmatpush1.bf16.msra.mxu0 0
          %440 = vmatprep.subr.bf16.mxu0 0
          %441 = vmatpush1.bf16.msra.mxu0 0
          %442 = vmatprep.subr.bf16.mxu0 0
          %443 = vmatpush1.bf16.msra.mxu0 0
          %444 = vmatprep.subr.bf16.mxu0 0
          %445 = vmatpush1.bf16.msra.mxu0 0
          %446 = vmatprep.subr.bf16.mxu0 0
          %447 = vmatpush1.bf16.msra.mxu0 0
          %448 = vmatprep.subr.bf16.mxu0 0
          %449 = vmatpush1.bf16.msra.mxu0 0
          %450 = vmatprep.subr.bf16.mxu0 0
          %451 = vmatpush1.bf16.msra.mxu0 0
          %452 = vmatprep.subr.bf16.mxu0 0
          %453 = vmatpush1.bf16.msra.mxu0 0
          %454 = vmatprep.subr.bf16.mxu0 0
          %455 = vmatpush1.bf16.msra.mxu0 0
          %456 = vmatprep.subr.bf16.mxu0 0
          %457 = vmatpush1.bf16.msra.mxu0 0
          %458 = vmatprep.subr.bf16.mxu0 0
          %459 = vmatpush1.bf16.msra.mxu0 0
          %460 = vmatprep.subr.bf16.mxu0 0
          %461 = vmatpush1.bf16.msra.mxu0 0
          %462 = vmatprep.subr.bf16.mxu0 0
          %463 = vmatpush1.bf16.msra.mxu0 0
          %464 = vmatprep.mubr.bf16.mxu0 0
          %465 = vmatmul.mubr.bf16.gmra.mrb[0].mxu0 %v430
          %v466 = vpop.f32.mrb[0].mxu0
          %v467 = vadd.f32 %v414, %v466
          %v468 = vpop.f32.mrb[0].mxu0
          %v469 = vpop.f32.mrb[0].mxu0
          %v470 = vpop.f32.mrb[0].mxu0
          %471 = vdwg.mxu0
          %v472 = vpack.c.bf16 %v467, %v467
          %v473 = vld [vmem:[%s4] sm:$0x1]
          %v475 = vlaneseq
          %v476 = vshrl.u32 %v475, 7
          %v477 = vsub.s32 0, %v476
          %v478 = vrot.slane %v473, %v477
          %v480 = vadd.f32 %v403, %v478
          %482 = vrot.lane.b32.xlu0 %v472, 96
          %v483 = vpop.permute.xlu0 %482
          %vm484 = vcmask 64512
          %v486 = vsel %vm484, %v472, 0
          %v489 = vsel %vm484, %v483, 0
          %491 = vmatprep.subr.bf16.mxu0 0
          %492 = vmatpush1.bf16.xpose.msra.mxu0 %v489
          %493 = vmatprep.subr.bf16.mxu0 0
          %494 = vmatpush1.bf16.xpose.msra.mxu0 0
          %495 = vmatprep.subr.bf16.mxu0 0
          %496 = vmatpush1.bf16.xpose.msra.mxu0 0
          %497 = vmatprep.subr.bf16.mxu0 0
          %498 = vmatpush1.bf16.xpose.msra.mxu0 0
          %499 = vmatprep.subr.bf16.mxu0 0
          %500 = vmatpush1.bf16.xpose.msra.mxu0 0
          %501 = vmatprep.subr.bf16.mxu0 0
          %502 = vmatpush1.bf16.xpose.msra.mxu0 0
          %503 = vmatprep.subr.bf16.mxu0 0
          %504 = vmatpush1.bf16.xpose.msra.mxu0 0
          %505 = vmatprep.subr.bf16.mxu0 0
          %506 = vmatpush1.bf16.xpose.msra.mxu0 0
          %507 = vmatprep.subr.bf16.mxu0 0
          %508 = vmatpush1.bf16.xpose.msra.mxu0 0
          %509 = vmatprep.subr.bf16.mxu0 0
          %510 = vmatpush1.bf16.xpose.msra.mxu0 0
          %511 = vmatprep.subr.bf16.mxu0 0
          %512 = vmatpush1.bf16.xpose.msra.mxu0 0
          %513 = vmatprep.subr.bf16.mxu0 0
          %514 = vmatpush1.bf16.xpose.msra.mxu0 0
          %515 = vmatprep.subr.bf16.mxu0 0
          %516 = vmatpush1.bf16.xpose.msra.mxu0 0
          %517 = vmatprep.subr.bf16.mxu0 0
          %518 = vmatpush1.bf16.xpose.msra.mxu0 0
          %519 = vmatprep.subr.bf16.mxu0 0
          %520 = vmatpush1.bf16.xpose.msra.mxu0 0
          %521 = vmatprep.subr.bf16.mxu0 0
          %522 = vmatpush1.bf16.xpose.msra.mxu0 0
          %523 = vmatprep.mubr.bf16.mxu0 0
          %524 = vmatmul.mubr.bf16.gmra.mrb[0].mxu0 %v486
          %v525 = vpop.f32.mrb[0].mxu0
          %v526 = vadd.f32 0.0, %v525
          %v527 = vpop.f32.mrb[0].mxu0
          %v528 = vpop.f32.mrb[0].mxu0
          %v529 = vpop.f32.mrb[0].mxu0
          %530 = vdwg.mxu0
          %v531 = vmul.f32 %v526, 0.35355338
          %v532 = vsel %vm484, %v531, -inf
          %533 = vmax.xlane.f32.xlu0 %v532
          %v534 = vpop.xlane.xlu0 %533
          %v535 = vsub.f32 %v531, %v534
          %v536 = vmul.f32 %v535, 1.442695
          %v537 = vpow.pop %v536
          %v538 = vsel %vm484, %v537, 0.0
          %539 = vadd.xlane.f32.xlu0 %v538
          %v540 = vpop.xlane.xlu0 %539
          %v541 = vrcp.pop %v540
          %v542 = vmul.f32 %v537, %v541
          %v543 = vpack.c.bf16 %v542, %v542
          %544 = vrot.lane.b32.xlu0 %v472, 64
          %v545 = vpop.permute.xlu0 %544
          %v547 = vsel %vm484, %v543, 0
          %vm549 = vcmask 1043456
          %v551 = vsel %vm549, %v545, 0
          %553 = vmatprep.subr.bf16.mxu0 0
          %554 = vmatpush1.bf16.msra.mxu0 %v551
          %555 = vmatprep.subr.bf16.mxu0 0
          %556 = vmatpush1.bf16.msra.mxu0 0
          %557 = vmatprep.subr.bf16.mxu0 0
          %558 = vmatpush1.bf16.msra.mxu0 0
          %559 = vmatprep.subr.bf16.mxu0 0
          %560 = vmatpush1.bf16.msra.mxu0 0
          %561 = vmatprep.subr.bf16.mxu0 0
          %562 = vmatpush1.bf16.msra.mxu0 0
          %563 = vmatprep.subr.bf16.mxu0 0
          %564 = vmatpush1.bf16.msra.mxu0 0
          %565 = vmatprep.subr.bf16.mxu0 0
          %566 = vmatpush1.bf16.msra.mxu0 0
          %567 = vmatprep.subr.bf16.mxu0 0
          %568 = vmatpush1.bf16.msra.mxu0 0
          %569 = vmatprep.subr.bf16.mxu0 0
          %570 = vmatpush1.bf16.msra.mxu0 0
          %571 = vmatprep.subr.bf16.mxu0 0
          %572 = vmatpush1.bf16.msra.mxu0 0
          %573 = vmatprep.subr.bf16.mxu0 0
          %574 = vmatpush1.bf16.msra.mxu0 0
          %575 = vmatprep.subr.bf16.mxu0 0
          %576 = vmatpush1.bf16.msra.mxu0 0
          %577 = vmatprep.subr.bf16.mxu0 0
          %578 = vmatpush1.bf16.msra.mxu0 0
          %579 = vmatprep.subr.bf16.mxu0 0
          %580 = vmatpush1.bf16.msra.mxu0 0
          %581 = vmatprep.subr.bf16.mxu0 0
          %582 = vmatpush1.bf16.msra.mxu0 0
          %583 = vmatprep.subr.bf16.mxu0 0
          %584 = vmatpush1.bf16.msra.mxu0 0
          %585 = vmatprep.mubr.bf16.mxu0 0
          %586 = vmatmul.mubr.bf16.gmra.mrb[0].mxu0 %v547
          %v587 = vpop.f32.mrb[0].mxu0
          %v588 = vadd.f32 0.0, %v587
          %v589 = vpop.f32.mrb[0].mxu0
          %v590 = vpop.f32.mrb[0].mxu0
          %v591 = vpop.f32.mrb[0].mxu0
          %592 = vdwg.mxu0
          %v593 = vpack.c.bf16 %v588, %v588
          %v594 = vld [vmem:[%s3] sm:$0xf]
          %v596 = vsel %vm484, %v593, 0
          %v599 = vsel %vm549, %v594, 0
          %601 = vmatprep.subr.bf16.mxu0 0
          %602 = vmatpush1.bf16.msra.mxu0 %v599
          %603 = vmatprep.subr.bf16.mxu0 0
          %604 = vmatpush1.bf16.msra.mxu0 0
          %605 = vmatprep.subr.bf16.mxu0 0
          %606 = vmatpush1.bf16.msra.mxu0 0
          %607 = vmatprep.subr.bf16.mxu0 0
          %608 = vmatpush1.bf16.msra.mxu0 0
          %609 = vmatprep.subr.bf16.mxu0 0
          %610 = vmatpush1.bf16.msra.mxu0 0
          %611 = vmatprep.subr.bf16.mxu0 0
          %612 = vmatpush1.bf16.msra.mxu0 0
          %613 = vmatprep.subr.bf16.mxu0 0
          %614 = vmatpush1.bf16.msra.mxu0 0
          %615 = vmatprep.subr.bf16.mxu0 0
          %616 = vmatpush1.bf16.msra.mxu0 0
          %617 = vmatprep.subr.bf16.mxu0 0
          %618 = vmatpush1.bf16.msra.mxu0 0
          %619 = vmatprep.subr.bf16.mxu0 0
          %620 = vmatpush1.bf16.msra.mxu0 0
          %621 = vmatprep.subr.bf16.mxu0 0
          %622 = vmatpush1.bf16.msra.mxu0 0
          %623 = vmatprep.subr.bf16.mxu0 0
          %624 = vmatpush1.bf16.msra.mxu0 0
          %625 = vmatprep.subr.bf16.mxu0 0
          %626 = vmatpush1.bf16.msra.mxu0 0
          %627 = vmatprep.subr.bf16.mxu0 0
          %628 = vmatpush1.bf16.msra.mxu0 0
          %629 = vmatprep.subr.bf16.mxu0 0
          %630 = vmatpush1.bf16.msra.mxu0 0
          %631 = vmatprep.subr.bf16.mxu0 0
          %632 = vmatpush1.bf16.msra.mxu0 0
          %633 = vmatprep.mubr.bf16.mxu0 0
          %634 = vmatmul.mubr.bf16.gmra.mrb[0].mxu0 %v596
          %v635 = vpop.f32.mrb[0].mxu0
          %v636 = vadd.f32 0.0, %v635
          %v637 = vpop.f32.mrb[0].mxu0
          %v638 = vpop.f32.mrb[0].mxu0
          %v639 = vpop.f32.mrb[0].mxu0
          %640 = vdwg.mxu0
          %v641 = vadd.f32 %v480, %v636
          %642 = vrot.lane.b32.xlu0 %v472, 120
          %v643 = vpop.permute.xlu0 %642
          %644 = vrot.lane.b32.xlu0 %v472, 88
          %v645 = vpop.permute.xlu0 %644
          %v647 = vsel %vm484, %v643, 0
          %v650 = vsel %vm484, %v645, 0
          %652 = vmatprep.subr.bf16.mxu0 0
          %653 = vmatpush1.bf16.xpose.msra.mxu0 %v650
          %654 = vmatprep.subr.bf16.mxu0 0
          %655 = vmatpush1.bf16.xpose.msra.mxu0 0
          %656 = vmatprep.subr.bf16.mxu0 0
          %657 = vmatpush1.bf16.xpose.msra.mxu0 0
          %658 = vmatprep.subr.bf16.mxu0 0
          %659 = vmatpush1.bf16.xpose.msra.mxu0 0
          %660 = vmatprep.subr.bf16.mxu0 0
          %661 = vmatpush1.bf16.xpose.msra.mxu0 0
          %662 = vmatprep.subr.bf16.mxu0 0
          %663 = vmatpush1.bf16.xpose.msra.mxu0 0
          %664 = vmatprep.subr.bf16.mxu0 0
          %665 = vmatpush1.bf16.xpose.msra.mxu0 0
          %666 = vmatprep.subr.bf16.mxu0 0
          %667 = vmatpush1.bf16.xpose.msra.mxu0 0
          %668 = vmatprep.subr.bf16.mxu0 0
          %669 = vmatpush1.bf16.xpose.msra.mxu0 0
          %670 = vmatprep.subr.bf16.mxu0 0
          %671 = vmatpush1.bf16.xpose.msra.mxu0 0
          %672 = vmatprep.subr.bf16.mxu0 0
          %673 = vmatpush1.bf16.xpose.msra.mxu0 0
          %674 = vmatprep.subr.bf16.mxu0 0
          %675 = vmatpush1.bf16.xpose.msra.mxu0 0
          %676 = vmatprep.subr.bf16.mxu0 0
          %677 = vmatpush1.bf16.xpose.msra.mxu0 0
          %678 = vmatprep.subr.bf16.mxu0 0
          %679 = vmatpush1.bf16.xpose.msra.mxu0 0
          %680 = vmatprep.subr.bf16.mxu0 0
          %681 = vmatpush1.bf16.xpose.msra.mxu0 0
          %682 = vmatprep.subr.bf16.mxu0 0
          %683 = vmatpush1.bf16.xpose.msra.mxu0 0
          %684 = vmatprep.mubr.bf16.mxu0 0
          %685 = vmatmul.mubr.bf16.gmra.mrb[0].mxu0 %v647
          %v686 = vpop.f32.mrb[0].mxu0
          %v687 = vadd.f32 0.0, %v686
          %v688 = vpop.f32.mrb[0].mxu0
          %v689 = vpop.f32.mrb[0].mxu0
          %v690 = vpop.f32.mrb[0].mxu0
          %691 = vdwg.mxu0
          %v692 = vmul.f32 %v687, 0.35355338
          %v693 = vsel %vm484, %v692, -inf
          %694 = vmax.xlane.f32.xlu0 %v693
          %v695 = vpop.xlane.xlu0 %694
          %v696 = vsub.f32 %v692, %v695
          %v697 = vmul.f32 %v696, 1.442695
          %v698 = vpow.pop %v697
          %v699 = vsel %vm484, %v698, 0.0
          %700 = vadd.xlane.f32.xlu0 %v699
          %v701 = vpop.xlane.xlu0 %700
          %v702 = vrcp.pop %v701
          %v703 = vmul.f32 %v698, %v702
          %v704 = vpack.c.bf16 %v703, %v703
          %705 = vrot.lane.b32.xlu0 %v472, 56
          %v706 = vpop.permute.xlu0 %705
          %v708 = vsel %vm484, %v704, 0
          %v711 = vsel %vm549, %v706, 0
          %713 = vmatprep.subr.bf16.mxu0 0
          %714 = vmatpush1.bf16.msra.mxu0 %v711
          %715 = vmatprep.subr.bf16.mxu0 0
          %716 = vmatpush1.bf16.msra.mxu0 0
          %717 = vmatprep.subr.bf16.mxu0 0
          %718 = vmatpush1.bf16.msra.mxu0 0
          %719 = vmatprep.subr.bf16.mxu0 0
          %720 = vmatpush1.bf16.msra.mxu0 0
          %721 = vmatprep.subr.bf16.mxu0 0
          %722 = vmatpush1.bf16.msra.mxu0 0
          %723 = vmatprep.subr.bf16.mxu0 0
          %724 = vmatpush1.bf16.msra.mxu0 0
          %725 = vmatprep.subr.bf16.mxu0 0
          %726 = vmatpush1.bf16.msra.mxu0 0
          %727 = vmatprep.subr.bf16.mxu0 0
          %728 = vmatpush1.bf16.msra.mxu0 0
          %729 = vmatprep.subr.bf16.mxu0 0
          %730 = vmatpush1.bf16.msra.mxu0 0
          %731 = vmatprep.subr.bf16.mxu0 0
          %732 = vmatpush1.bf16.msra.mxu0 0
          %733 = vmatprep.subr.bf16.mxu0 0
          %734 = vmatpush1.bf16.msra.mxu0 0
          %735 = vmatprep.subr.bf16.mxu0 0
          %736 = vmatpush1.bf16.msra.mxu0 0
          %737 = vmatprep.subr.bf16.mxu0 0
          %738 = vmatpush1.bf16.msra.mxu0 0
          %739 = vmatprep.subr.bf16.mxu0 0
          %740 = vmatpush1.bf16.msra.mxu0 0
          %741 = vmatprep.subr.bf16.mxu0 0
          %742 = vmatpush1.bf16.msra.mxu0 0
          %743 = vmatprep.subr.bf16.mxu0 0
          %744 = vmatpush1.bf16.msra.mxu0 0
          %745 = vmatprep.mubr.bf16.mxu0 0
          %746 = vmatmul.mubr.bf16.gmra.mrb[0].mxu0 %v708
          %v747 = vpop.f32.mrb[0].mxu0
          %v748 = vadd.f32 0.0, %v747
          %v749 = vpop.f32.mrb[0].mxu0
          %v750 = vpop.f32.mrb[0].mxu0
          %v751 = vpop.f32.mrb[0].mxu0
          %752 = vdwg.mxu0
          %v753 = vpack.c.bf16 %v748, %v748
          %v754 = vld [vmem:[%s3 + $0x4] sm:$0xf]
          %v756 = vsel %vm484, %v753, 0
          %v759 = vsel %vm549, %v754, 0
          %761 = vmatprep.subr.bf16.mxu0 0
          %762 = vmatpush1.bf16.msra.mxu0 %v759
          %763 = vmatprep.subr.bf16.mxu0 0
          %764 = vmatpush1.bf16.msra.mxu0 0
          %765 = vmatprep.subr.bf16.mxu0 0
          %766 = vmatpush1.bf16.msra.mxu0 0
          %767 = vmatprep.subr.bf16.mxu0 0
          %768 = vmatpush1.bf16.msra.mxu0 0
          %769 = vmatprep.subr.bf16.mxu0 0
          %770 = vmatpush1.bf16.msra.mxu0 0
          %771 = vmatprep.subr.bf16.mxu0 0
          %772 = vmatpush1.bf16.msra.mxu0 0
          %773 = vmatprep.subr.bf16.mxu0 0
          %774 = vmatpush1.bf16.msra.mxu0 0
          %775 = vmatprep.subr.bf16.mxu0 0
          %776 = vmatpush1.bf16.msra.mxu0 0
          %777 = vmatprep.subr.bf16.mxu0 0
          %778 = vmatpush1.bf16.msra.mxu0 0
          %779 = vmatprep.subr.bf16.mxu0 0
          %780 = vmatpush1.bf16.msra.mxu0 0
          %781 = vmatprep.subr.bf16.mxu0 0
          %782 = vmatpush1.bf16.msra.mxu0 0
          %783 = vmatprep.subr.bf16.mxu0 0
          %784 = vmatpush1.bf16.msra.mxu0 0
          %785 = vmatprep.subr.bf16.mxu0 0
          %786 = vmatpush1.bf16.msra.mxu0 0
          %787 = vmatprep.subr.bf16.mxu0 0
          %788 = vmatpush1.bf16.msra.mxu0 0
          %789 = vmatprep.subr.bf16.mxu0 0
          %790 = vmatpush1.bf16.msra.mxu0 0
          %791 = vmatprep.subr.bf16.mxu0 0
          %792 = vmatpush1.bf16.msra.mxu0 0
          %793 = vmatprep.mubr.bf16.mxu0 0
          %794 = vmatmul.mubr.bf16.gmra.mrb[0].mxu0 %v756
          %v795 = vpop.f32.mrb[0].mxu0
          %v796 = vadd.f32 0.0, %v795
          %v797 = vpop.f32.mrb[0].mxu0
          %v798 = vpop.f32.mrb[0].mxu0
          %v799 = vpop.f32.mrb[0].mxu0
          %800 = vdwg.mxu0
          %v801 = vadd.f32 %v641, %v796
          %802 = vrot.lane.b32.xlu0 %v472, 112
          %v803 = vpop.permute.xlu0 %802
          %804 = vrot.lane.b32.xlu0 %v472, 80
          %v805 = vpop.permute.xlu0 %804
          %v807 = vsel %vm484, %v803, 0
          %v810 = vsel %vm484, %v805, 0
          %812 = vmatprep.subr.bf16.mxu0 0
          %813 = vmatpush1.bf16.xpose.msra.mxu0 %v810
          %814 = vmatprep.subr.bf16.mxu0 0
          %815 = vmatpush1.bf16.xpose.msra.mxu0 0
          %816 = vmatprep.subr.bf16.mxu0 0
          %817 = vmatpush1.bf16.xpose.msra.mxu0 0
          %818 = vmatprep.subr.bf16.mxu0 0
          %819 = vmatpush1.bf16.xpose.msra.mxu0 0
          %820 = vmatprep.subr.bf16.mxu0 0
          %821 = vmatpush1.bf16.xpose.msra.mxu0 0
          %822 = vmatprep.subr.bf16.mxu0 0
          %823 = vmatpush1.bf16.xpose.msra.mxu0 0
          %824 = vmatprep.subr.bf16.mxu0 0
          %825 = vmatpush1.bf16.xpose.msra.mxu0 0
          %826 = vmatprep.subr.bf16.mxu0 0
          %827 = vmatpush1.bf16.xpose.msra.mxu0 0
          %828 = vmatprep.subr.bf16.mxu0 0
          %829 = vmatpush1.bf16.xpose.msra.mxu0 0
          %830 = vmatprep.subr.bf16.mxu0 0
          %831 = vmatpush1.bf16.xpose.msra.mxu0 0
          %832 = vmatprep.subr.bf16.mxu0 0
          %833 = vmatpush1.bf16.xpose.msra.mxu0 0
          %834 = vmatprep.subr.bf16.mxu0 0
          %835 = vmatpush1.bf16.xpose.msra.mxu0 0
          %836 = vmatprep.subr.bf16.mxu0 0
          %837 = vmatpush1.bf16.xpose.msra.mxu0 0
          %838 = vmatprep.subr.bf16.mxu0 0
          %839 = vmatpush1.bf16.xpose.msra.mxu0 0
          %840 = vmatprep.subr.bf16.mxu0 0
          %841 = vmatpush1.bf16.xpose.msra.mxu0 0
          %842 = vmatprep.subr.bf16.mxu0 0
          %843 = vmatpush1.bf16.xpose.msra.mxu0 0
          %844 = vmatprep.mubr.bf16.mxu0 0
          %845 = vmatmul.mubr.bf16.gmra.mrb[0].mxu0 %v807
          %v846 = vpop.f32.mrb[0].mxu0
          %v847 = vadd.f32 0.0, %v846
          %v848 = vpop.f32.mrb[0].mxu0
          %v849 = vpop.f32.mrb[0].mxu0
          %v850 = vpop.f32.mrb[0].mxu0
          %851 = vdwg.mxu0
          %v852 = vmul.f32 %v847, 0.35355338
          %v853 = vsel %vm484, %v852, -inf
          %854 = vmax.xlane.f32.xlu0 %v853
          %v855 = vpop.xlane.xlu0 %854
          %v856 = vsub.f32 %v852, %v855
          %v857 = vmul.f32 %v856, 1.442695
          %v858 = vpow.pop %v857
          %v859 = vsel %vm484, %v858, 0.0
          %860 = vadd.xlane.f32.xlu0 %v859
          %v861 = vpop.xlane.xlu0 %860
          %v862 = vrcp.pop %v861
          %v863 = vmul.f32 %v858, %v862
          %v864 = vpack.c.bf16 %v863, %v863
          %865 = vrot.lane.b32.xlu0 %v472, 48
          %v866 = vpop.permute.xlu0 %865
          %v868 = vsel %vm484, %v864, 0
          %v871 = vsel %vm549, %v866, 0
          %873 = vmatprep.subr.bf16.mxu0 0
          %874 = vmatpush1.bf16.msra.mxu0 %v871
          %875 = vmatprep.subr.bf16.mxu0 0
          %876 = vmatpush1.bf16.msra.mxu0 0
          %877 = vmatprep.subr.bf16.mxu0 0
          %878 = vmatpush1.bf16.msra.mxu0 0
          %879 = vmatprep.subr.bf16.mxu0 0
          %880 = vmatpush1.bf16.msra.mxu0 0
          %881 = vmatprep.subr.bf16.mxu0 0
          %882 = vmatpush1.bf16.msra.mxu0 0
          %883 = vmatprep.subr.bf16.mxu0 0
          %884 = vmatpush1.bf16.msra.mxu0 0
          %885 = vmatprep.subr.bf16.mxu0 0
          %886 = vmatpush1.bf16.msra.mxu0 0
          %887 = vmatprep.subr.bf16.mxu0 0
          %888 = vmatpush1.bf16.msra.mxu0 0
          %889 = vmatprep.subr.bf16.mxu0 0
          %890 = vmatpush1.bf16.msra.mxu0 0
          %891 = vmatprep.subr.bf16.mxu0 0
          %892 = vmatpush1.bf16.msra.mxu0 0
          %893 = vmatprep.subr.bf16.mxu0 0
          %894 = vmatpush1.bf16.msra.mxu0 0
          %895 = vmatprep.subr.bf16.mxu0 0
          %896 = vmatpush1.bf16.msra.mxu0 0
          %897 = vmatprep.subr.bf16.mxu0 0
          %898 = vmatpush1.bf16.msra.mxu0 0
          %899 = vmatprep.subr.bf16.mxu0 0
          %900 = vmatpush1.bf16.msra.mxu0 0
          %901 = vmatprep.subr.bf16.mxu0 0
          %902 = vmatpush1.bf16.msra.mxu0 0
          %903 = vmatprep.subr.bf16.mxu0 0
          %904 = vmatpush1.bf16.msra.mxu0 0
          %905 = vmatprep.mubr.bf16.mxu0 0
          %906 = vmatmul.mubr.bf16.gmra.mrb[0].mxu0 %v868
          %v907 = vpop.f32.mrb[0].mxu0
          %v908 = vadd.f32 0.0, %v907
          %v909 = vpop.f32.mrb[0].mxu0
          %v910 = vpop.f32.mrb[0].mxu0
          %v911 = vpop.f32.mrb[0].mxu0
          %912 = vdwg.mxu0
          %v913 = vpack.c.bf16 %v908, %v908
          %v914 = vld [vmem:[%s3 + $0x8] sm:$0xf]
          %v916 = vsel %vm484, %v913, 0
          %v919 = vsel %vm549, %v914, 0
          %921 = vmatprep.subr.bf16.mxu0 0
          %922 = vmatpush1.bf16.msra.mxu0 %v919
          %923 = vmatprep.subr.bf16.mxu0 0
          %924 = vmatpush1.bf16.msra.mxu0 0
          %925 = vmatprep.subr.bf16.mxu0 0
          %926 = vmatpush1.bf16.msra.mxu0 0
          %927 = vmatprep.subr.bf16.mxu0 0
          %928 = vmatpush1.bf16.msra.mxu0 0
          %929 = vmatprep.subr.bf16.mxu0 0
          %930 = vmatpush1.bf16.msra.mxu0 0
          %931 = vmatprep.subr.bf16.mxu0 0
          %932 = vmatpush1.bf16.msra.mxu0 0
          %933 = vmatprep.subr.bf16.mxu0 0
          %934 = vmatpush1.bf16.msra.mxu0 0
          %935 = vmatprep.subr.bf16.mxu0 0
          %936 = vmatpush1.bf16.msra.mxu0 0
          %937 = vmatprep.subr.bf16.mxu0 0
          %938 = vmatpush1.bf16.msra.mxu0 0
          %939 = vmatprep.subr.bf16.mxu0 0
          %940 = vmatpush1.bf16.msra.mxu0 0
          %941 = vmatprep.subr.bf16.mxu0 0
          %942 = vmatpush1.bf16.msra.mxu0 0
          %943 = vmatprep.subr.bf16.mxu0 0
          %944 = vmatpush1.bf16.msra.mxu0 0
          %945 = vmatprep.subr.bf16.mxu0 0
          %946 = vmatpush1.bf16.msra.mxu0 0
          %947 = vmatprep.subr.bf16.mxu0 0
          %948 = vmatpush1.bf16.msra.mxu0 0
          %949 = vmatprep.subr.bf16.mxu0 0
          %950 = vmatpush1.bf16.msra.mxu0 0
          %951 = vmatprep.subr.bf16.mxu0 0
          %952 = vmatpush1.bf16.msra.mxu0 0
          %953 = vmatprep.mubr.bf16.mxu0 0
          %954 = vmatmul.mubr.bf16.gmra.mrb[0].mxu0 %v916
          %v955 = vpop.f32.mrb[0].mxu0
          %v956 = vadd.f32 0.0, %v955
          %v957 = vpop.f32.mrb[0].mxu0
          %v958 = vpop.f32.mrb[0].mxu0
          %v959 = vpop.f32.mrb[0].mxu0
          %960 = vdwg.mxu0
          %v961 = vadd.f32 %v801, %v956
          %962 = vrot.lane.b32.xlu0 %v472, 104
          %v963 = vpop.permute.xlu0 %962
          %964 = vrot.lane.b32.xlu0 %v472, 72
          %v965 = vpop.permute.xlu0 %964
          %v967 = vsel %vm484, %v963, 0
          %v970 = vsel %vm484, %v965, 0
          %972 = vmatprep.subr.bf16.mxu0 0
          %973 = vmatpush1.bf16.xpose.msra.mxu0 %v970
          %974 = vmatprep.subr.bf16.mxu0 0
          %975 = vmatpush1.bf16.xpose.msra.mxu0 0
          %976 = vmatprep.subr.bf16.mxu0 0
          %977 = vmatpush1.bf16.xpose.msra.mxu0 0
          %978 = vmatprep.subr.bf16.mxu0 0
          %979 = vmatpush1.bf16.xpose.msra.mxu0 0
          %980 = vmatprep.subr.bf16.mxu0 0
          %981 = vmatpush1.bf16.xpose.msra.mxu0 0
          %982 = vmatprep.subr.bf16.mxu0 0
          %983 = vmatpush1.bf16.xpose.msra.mxu0 0
          %984 = vmatprep.subr.bf16.mxu0 0
          %985 = vmatpush1.bf16.xpose.msra.mxu0 0
          %986 = vmatprep.subr.bf16.mxu0 0
          %987 = vmatpush1.bf16.xpose.msra.mxu0 0
          %988 = vmatprep.subr.bf16.mxu0 0
          %989 = vmatpush1.bf16.xpose.msra.mxu0 0
          %990 = vmatprep.subr.bf16.mxu0 0
          %991 = vmatpush1.bf16.xpose.msra.mxu0 0
          %992 = vmatprep.subr.bf16.mxu0 0
          %993 = vmatpush1.bf16.xpose.msra.mxu0 0
          %994 = vmatprep.subr.bf16.mxu0 0
          %995 = vmatpush1.bf16.xpose.msra.mxu0 0
          %996 = vmatprep.subr.bf16.mxu0 0
          %997 = vmatpush1.bf16.xpose.msra.mxu0 0
          %998 = vmatprep.subr.bf16.mxu0 0
          %999 = vmatpush1.bf16.xpose.msra.mxu0 0
          %1000 = vmatprep.subr.bf16.mxu0 0
          %1001 = vmatpush1.bf16.xpose.msra.mxu0 0
          %1002 = vmatprep.subr.bf16.mxu0 0
          %1003 = vmatpush1.bf16.xpose.msra.mxu0 0
          %1004 = vmatprep.mubr.bf16.mxu0 0
          %1005 = vmatmul.mubr.bf16.gmra.mrb[0].mxu0 %v967
          %v1006 = vpop.f32.mrb[0].mxu0
          %v1007 = vadd.f32 0.0, %v1006
          %v1008 = vpop.f32.mrb[0].mxu0
          %v1009 = vpop.f32.mrb[0].mxu0
          %v1010 = vpop.f32.mrb[0].mxu0
          %1011 = vdwg.mxu0
          %v1012 = vmul.f32 %v1007, 0.35355338
          %v1013 = vsel %vm484, %v1012, -inf
          %1014 = vmax.xlane.f32.xlu0 %v1013
          %v1015 = vpop.xlane.xlu0 %1014
          %v1016 = vsub.f32 %v1012, %v1015
          %v1017 = vmul.f32 %v1016, 1.442695
          %v1018 = vpow.pop %v1017
          %v1019 = vsel %vm484, %v1018, 0.0
          %1020 = vadd.xlane.f32.xlu0 %v1019
          %v1021 = vpop.xlane.xlu0 %1020
          %v1022 = vrcp.pop %v1021
          %v1023 = vmul.f32 %v1018, %v1022
          %v1024 = vpack.c.bf16 %v1023, %v1023
          %1025 = vrot.lane.b32.xlu0 %v472, 40
          %v1026 = vpop.permute.xlu0 %1025
          %v1028 = vsel %vm484, %v1024, 0
          %v1031 = vsel %vm549, %v1026, 0
          %1033 = vmatprep.subr.bf16.mxu0 0
          %1034 = vmatpush1.bf16.msra.mxu0 %v1031
          %1035 = vmatprep.subr.bf16.mxu0 0
          %1036 = vmatpush1.bf16.msra.mxu0 0
          %1037 = vmatprep.subr.bf16.mxu0 0
          %1038 = vmatpush1.bf16.msra.mxu0 0
          %1039 = vmatprep.subr.bf16.mxu0 0
          %1040 = vmatpush1.bf16.msra.mxu0 0
          %1041 = vmatprep.subr.bf16.mxu0 0
          %1042 = vmatpush1.bf16.msra.mxu0 0
          %1043 = vmatprep.subr.bf16.mxu0 0
          %1044 = vmatpush1.bf16.msra.mxu0 0
          %1045 = vmatprep.subr.bf16.mxu0 0
          %1046 = vmatpush1.bf16.msra.mxu0 0
          %1047 = vmatprep.subr.bf16.mxu0 0
          %1048 = vmatpush1.bf16.msra.mxu0 0
          %1049 = vmatprep.subr.bf16.mxu0 0
          %1050 = vmatpush1.bf16.msra.mxu0 0
          %1051 = vmatprep.subr.bf16.mxu0 0
          %1052 = vmatpush1.bf16.msra.mxu0 0
          %1053 = vmatprep.subr.bf16.mxu0 0
          %1054 = vmatpush1.bf16.msra.mxu0 0
          %1055 = vmatprep.subr.bf16.mxu0 0
          %1056 = vmatpush1.bf16.msra.mxu0 0
          %1057 = vmatprep.subr.bf16.mxu0 0
          %1058 = vmatpush1.bf16.msra.mxu0 0
          %1059 = vmatprep.subr.bf16.mxu0 0
          %1060 = vmatpush1.bf16.msra.mxu0 0
          %1061 = vmatprep.subr.bf16.mxu0 0
          %1062 = vmatpush1.bf16.msra.mxu0 0
          %1063 = vmatprep.subr.bf16.mxu0 0
          %1064 = vmatpush1.bf16.msra.mxu0 0
          %1065 = vmatprep.mubr.bf16.mxu0 0
          %1066 = vmatmul.mubr.bf16.gmra.mrb[0].mxu0 %v1028
          %v1067 = vpop.f32.mrb[0].mxu0
          %v1068 = vadd.f32 0.0, %v1067
          %v1069 = vpop.f32.mrb[0].mxu0
          %v1070 = vpop.f32.mrb[0].mxu0
          %v1071 = vpop.f32.mrb[0].mxu0
          %1072 = vdwg.mxu0
          %v1073 = vpack.c.bf16 %v1068, %v1068
          %v1074 = vld [vmem:[%s3 + $0xc] sm:$0xf]
          %v1076 = vsel %vm484, %v1073, 0
          %v1079 = vsel %vm549, %v1074, 0
          %1081 = vmatprep.subr.bf16.mxu0 0
          %1082 = vmatpush1.bf16.msra.mxu0 %v1079
          %1083 = vmatprep.subr.bf16.mxu0 0
          %1084 = vmatpush1.bf16.msra.mxu0 0
          %1085 = vmatprep.subr.bf16.mxu0 0
          %1086 = vmatpush1.bf16.msra.mxu0 0
          %1087 = vmatprep.subr.bf16.mxu0 0
          %1088 = vmatpush1.bf16.msra.mxu0 0
          %1089 = vmatprep.subr.bf16.mxu0 0
          %1090 = vmatpush1.bf16.msra.mxu0 0
          %1091 = vmatprep.subr.bf16.mxu0 0
          %1092 = vmatpush1.bf16.msra.mxu0 0
          %1093 = vmatprep.subr.bf16.mxu0 0
          %1094 = vmatpush1.bf16.msra.mxu0 0
          %1095 = vmatprep.subr.bf16.mxu0 0
          %1096 = vmatpush1.bf16.msra.mxu0 0
          %1097 = vmatprep.subr.bf16.mxu0 0
          %1098 = vmatpush1.bf16.msra.mxu0 0
          %1099 = vmatprep.subr.bf16.mxu0 0
          %1100 = vmatpush1.bf16.msra.mxu0 0
          %1101 = vmatprep.subr.bf16.mxu0 0
          %1102 = vmatpush1.bf16.msra.mxu0 0
          %1103 = vmatprep.subr.bf16.mxu0 0
          %1104 = vmatpush1.bf16.msra.mxu0 0
          %1105 = vmatprep.subr.bf16.mxu0 0
          %1106 = vmatpush1.bf16.msra.mxu0 0
          %1107 = vmatprep.subr.bf16.mxu0 0
          %1108 = vmatpush1.bf16.msra.mxu0 0
          %1109 = vmatprep.subr.bf16.mxu0 0
          %1110 = vmatpush1.bf16.msra.mxu0 0
          %1111 = vmatprep.subr.bf16.mxu0 0
          %1112 = vmatpush1.bf16.msra.mxu0 0
          %1113 = vmatprep.mubr.bf16.mxu0 0
          %1114 = vmatmul.mubr.bf16.gmra.mrb[0].mxu0 %v1076
          %v1115 = vpop.f32.mrb[0].mxu0
          %v1116 = vadd.f32 0.0, %v1115
          %v1117 = vpop.f32.mrb[0].mxu0
          %v1118 = vpop.f32.mrb[0].mxu0
          %v1119 = vpop.f32.mrb[0].mxu0
          %1120 = vdwg.mxu0
          %v1121 = vadd.f32 %v961, %v1116
          %v1122 = vpack.c.bf16 %v1121, %v1121
          %vm1123 = vcmask 257024
          %1124 = vst.msk [vmem:[#allocation2] sm:$0xf] %vm1123, %v1122
          %v1125 = vld [vmem:[%s8] sm:$0x1]
          %v1127 = vlaneseq
          %v1128 = vshrl.u32 %v1127, 7
          %v1129 = vsub.s32 0, %v1128
          %v1130 = vrot.slane %v1125, %v1129
          %v1132 = vadd.f32 %v1121, %v1130
          %1133 = vst.msk [vmem:[#allocation3] sm:$0xff] %vm428, %v1132
        $region64: #{tpu_custom_call.1} parent=55 // pred_fallthru
          _
        %v1134 = vld [vmem:[#allocation2] sm:$0xf]
        %v1135 = vld [vmem:[#allocation4] sm:$0xf]
        %v1136 = vld [vmem:[#allocation4 + $0x4] sm:$0xf]
        %v1137 = vld [vmem:[#allocation4 + $0x8] sm:$0xf]
        %v1138 = vld [vmem:[#allocation4 + $0xc] sm:$0xf]
        %v1139 = vld [vmem:[%s391] sm:$0x1]
        %v1141 = vlaneseq
        %v1142 = vshrl.u32 %v1141, 7
        %v1143 = vsub.s32 0, %v1142
        %v1144 = vrot.slane %v1139, %v1143
        %v1150 = vunpack.c.l.b16 %v1135
        %v1151 = vunpack.c.l.b16 %v1136
        %v1152 = vunpack.c.l.b16 %v1137
        %v1153 = vunpack.c.l.b16 %v1138
        %v1154 = vpack.c.b16 %v1151, %v1150
        %v1155 = vpack.c.b16 %v1153, %v1152
        %vm1158 = vcmask 261120
        %v1160 = vsel %vm1158, %v1134, 0
        %1162 = vmatprep.subr.bf16.mxu0 0
        %1163 = vmatpush1.bf16.msra.mxu0 %v1154
        %1164 = vmatprep.subr.bf16.mxu0 0
        %1165 = vmatpush1.bf16.msra.mxu0 %v1155
        %1166 = vmatprep.subr.bf16.mxu0 0
        %1167 = vmatpush1.bf16.msra.mxu0 0
        %1168 = vmatprep.subr.bf16.mxu0 0
        %1169 = vmatpush1.bf16.msra.mxu0 0
        %1170 = vmatprep.subr.bf16.mxu0 0
        %1171 = vmatpush1.bf16.msra.mxu0 0
        %1172 = vmatprep.subr.bf16.mxu0 0
        %1173 = vmatpush1.bf16.msra.mxu0 0
        %1174 = vmatprep.subr.bf16.mxu0 0
        %1175 = vmatpush1.bf16.msra.mxu0 0
        %1176 = vmatprep.subr.bf16.mxu0 0
        %1177 = vmatpush1.bf16.msra.mxu0 0
        %1178 = vmatprep.subr.bf16.mxu0 0
        %1179 = vmatpush1.bf16.msra.mxu0 0
        %1180 = vmatprep.subr.bf16.mxu0 0
        %1181 = vmatpush1.bf16.msra.mxu0 0
        %1182 = vmatprep.subr.bf16.mxu0 0
        %1183 = vmatpush1.bf16.msra.mxu0 0
        %1184 = vmatprep.subr.bf16.mxu0 0
        %1185 = vmatpush1.bf16.msra.mxu0 0
        %1186 = vmatprep.subr.bf16.mxu0 0
        %1187 = vmatpush1.bf16.msra.mxu0 0
        %1188 = vmatprep.subr.bf16.mxu0 0
        %1189 = vmatpush1.bf16.msra.mxu0 0
        %1190 = vmatprep.subr.bf16.mxu0 0
        %1191 = vmatpush1.bf16.msra.mxu0 0
        %1192 = vmatprep.subr.bf16.mxu0 0
        %1193 = vmatpush1.bf16.msra.mxu0 0
        %1194 = vmatprep.mubr.bf16.mxu0 0
        %1195 = vmatmul.mubr.bf16.gmra.mrb[0].mxu0 %v1160
        %v1196 = vpop.f32.mrb[0].mxu0
        %v1197 = vadd.f32 %v1144, %v1196
        %v1198 = vpop.f32.mrb[0].mxu0
        %v1199 = vpop.f32.mrb[0].mxu0
        %v1200 = vpop.f32.mrb[0].mxu0
        %1201 = vdwg.mxu0
        %v1202 = vmax.f32 %v1197, 0.0
        %v1203 = vld [vmem:[#allocation3] sm:$0xff]
        %v1204 = vpack.c.bf16 %v1202, %v1202
        %v1205 = vld [vmem:[%s396] sm:$0xf]
        %v1206 = vld [vmem:[%s396 + $0x4] sm:$0xf]
        %v1207 = vld [vmem:[%s396 + $0x8] sm:$0xf]
        %v1208 = vld [vmem:[%s396 + $0xc] sm:$0xf]
        %v1209 = vld [vmem:[%s396 + $0x10] sm:$0xf]
        %v1210 = vld [vmem:[%s396 + $0x14] sm:$0xf]
        %v1211 = vld [vmem:[%s396 + $0x18] sm:$0xf]
        %v1212 = vld [vmem:[%s396 + $0x1c] sm:$0xf]
        %v1221 = vunpack.c.l.b16 %v1205
        %v1222 = vunpack.c.l.b16 %v1206
        %v1223 = vunpack.c.l.b16 %v1207
        %v1224 = vunpack.c.l.b16 %v1208
        %v1225 = vunpack.c.l.b16 %v1209
        %v1226 = vunpack.c.l.b16 %v1210
        %v1227 = vunpack.c.l.b16 %v1211
        %v1228 = vunpack.c.l.b16 %v1212
        %v1229 = vpack.c.b16 %v1222, %v1221
        %v1230 = vpack.c.b16 %v1224, %v1223
        %v1231 = vpack.c.b16 %v1226, %v1225
        %v1232 = vpack.c.b16 %v1228, %v1227
        %vm1237 = vcmask 523264
        %v1239 = vsel %vm1237, %v1204, 0
        %1241 = vmatprep.subr.bf16.mxu0 0
        %1242 = vmatpush1.bf16.msra.mxu0 %v1229
        %1243 = vmatprep.subr.bf16.mxu0 0
        %1244 = vmatpush1.bf16.msra.mxu0 %v1230
        %1245 = vmatprep.subr.bf16.mxu0 0
        %1246 = vmatpush1.bf16.msra.mxu0 %v1231
        %1247 = vmatprep.subr.bf16.mxu0 0
        %1248 = vmatpush1.bf16.msra.mxu0 %v1232
        %1249 = vmatprep.subr.bf16.mxu0 0
        %1250 = vmatpush1.bf16.msra.mxu0 0
        %1251 = vmatprep.subr.bf16.mxu0 0
        %1252 = vmatpush1.bf16.msra.mxu0 0
        %1253 = vmatprep.subr.bf16.mxu0 0
        %1254 = vmatpush1.bf16.msra.mxu0 0
        %1255 = vmatprep.subr.bf16.mxu0 0
        %1256 = vmatpush1.bf16.msra.mxu0 0
        %1257 = vmatprep.subr.bf16.mxu0 0
        %1258 = vmatpush1.bf16.msra.mxu0 0
        %1259 = vmatprep.subr.bf16.mxu0 0
        %1260 = vmatpush1.bf16.msra.mxu0 0
        %1261 = vmatprep.subr.bf16.mxu0 0
        %1262 = vmatpush1.bf16.msra.mxu0 0
        %1263 = vmatprep.subr.bf16.mxu0 0
        %1264 = vmatpush1.bf16.msra.mxu0 0
        %1265 = vmatprep.subr.bf16.mxu0 0
        %1266 = vmatpush1.bf16.msra.mxu0 0
        %1267 = vmatprep.subr.bf16.mxu0 0
        %1268 = vmatpush1.bf16.msra.mxu0 0
        %1269 = vmatprep.subr.bf16.mxu0 0
        %1270 = vmatpush1.bf16.msra.mxu0 0
        %1271 = vmatprep.subr.bf16.mxu0 0
        %1272 = vmatpush1.bf16.msra.mxu0 0
        %1273 = vmatprep.mubr.bf16.mxu0 0
        %1274 = vmatmul.mubr.bf16.gmra.mrb[0].mxu0 %v1239
        %v1275 = vpop.f32.mrb[0].mxu0
        %v1276 = vadd.f32 0.0, %v1275
        %v1277 = vpop.f32.mrb[0].mxu0
        %v1278 = vpop.f32.mrb[0].mxu0
        %v1279 = vpop.f32.mrb[0].mxu0
        %1280 = vdwg.mxu0
        %v1281 = vadd.f32 %v1203, %v1276
        %1282 = vst.msk [vmem:[#allocation3] sm:$0xff] %vm1158, %v1281
        // Predicated region
        $region65: #{tpu_custom_call.1} parent=55 // pred_check
          %p1283 = pneg %p399
        $region66: #{tpu_custom_call.1} parent=55 // pred_check_branch
          %1285 = sbr.rel (%p1283) target = $region68
        $region67: #{tpu_custom_call.1} parent=55 // pred_region
          %v1286 = vld [vmem:[#allocation3] sm:$0xff]
          %1287 = vst.msk [vmem:[%s384] sm:$0xff] %vm1158, %v1286
        $region68: #{tpu_custom_call.1} parent=55 // pred_fallthru
          _
        %s1288 = sand.u32 %s253, 1
        %s1289 = scalar_lea.sflag [#allocation6], %s1288
        %s1290 = sand.u32 %s253, 1
        %s1291 = smul.addr %s1290, 8
        %s1292 = scalar_lea.vmem [#allocation7], %s1291
        // Predicated region
        $region69: #{tpu_custom_call.1} parent=55 // pred_check
          %p1293 = pneg %p263
        $region70: #{tpu_custom_call.1} parent=55 // pred_check_branch
          %1295 = sbr.rel (%p1293) target = $region72
        $region71: #{tpu_custom_call.1} parent=55 // pred_region
          %s1297 = ssub.s32 128, 128
          %1298 = vsyncadd %s1289, %s1297
          %s1299 = smul.addr %s28, 128
          %s1300 = scalar_lea.hbm %s9, %s1299
          %s1302 = sshll.u32 %s1292, 4
          %s1303 = int_to_ptr.vmem [resolvable:$true] %s1302
          %1305 = dma.vmem_to_hbm [thread:$0]  %s1303, 128, %s1300, %s1289
        $region72: #{tpu_custom_call.1} parent=55 // pred_fallthru
          _
      $region56: #{tpu_custom_call.1} parent=5 // pred_fallthru
        _
      %p1306 = scmp.le.s32.totalorder 2, %s19
      // Predicated region
      $region73: #{tpu_custom_call.1} parent=5 // pred_check
        %p1307 = pneg %p1306
      $region74: #{tpu_custom_call.1} parent=5 // pred_check_branch
        %1309 = sbr.rel (%p1307) target = $region76
      $region75: #{tpu_custom_call.1} parent=5 // pred_region
        %s1310 = ssub.s32 %s19, 2
        // Predicated region
        $region77: #{tpu_custom_call.1} parent=75 // pred_check
          %p1311 = pneg %p269
        $region78: #{tpu_custom_call.1} parent=75 // pred_check_branch
          %1313 = sbr.rel (%p1311) target = $region80
        $region79: #{tpu_custom_call.1} parent=75 // pred_region
          %s1314 = sand.u32 %s254, 1
          %s1315 = scalar_lea.sflag [#allocation6], %s1314
          %s1316 = sand.u32 %s254, 1
          %s1317 = smul.addr %s1316, 8
          %s1318 = scalar_lea.vmem [#allocation7], %s1317
          %1319 = dma.done %s1315, 128
        $region80: #{tpu_custom_call.1} parent=75 // pred_fallthru
          _
      $region76: #{tpu_custom_call.1} parent=5 // pred_fallthru
        _
    $region6: #{tpu_custom_call.1} parent=1 // loop_footer
      %s23 = sadd.s32 1, %s19
    $region7: #{tpu_custom_call.1} parent=1 // loop_footer_branch
      %18 = sbr.rel target = $region3
    $region8: #{tpu_custom_call.1} parent=1 // loop_exit
      _
    %1320 = vsyncpa [#allocation5], 1
    %s1321 = scalar_lea.sflag [#allocation5], 1
    %1322 = vsyncpa %s1321, 1
    %1323 = vsyncpa [#allocation6], 1
    %s1324 = scalar_lea.sflag [#allocation6], 1
    %1325 = vsyncpa %s1324, 1

</llo_original>
